<compile_context>
chip_gen: v6e
topology: v6e:2x2x1
jax: 0.10.0
libtpu: 0.0.40
codegen_flags: <defaults>
</compile_context>

<pallas_src>
import functools

import jax
import jax.numpy as jnp
from jax.experimental import pallas as pl
from jax.experimental.pallas import tpu as pltpu


# --------------------------------------------------------------------------- utils
def _round_up(x, m):
    return ((x + m - 1) // m) * m


def _vmem_limit(nbytes, headroom=8 << 20, cap=48 << 20):
    """Derived VMEM budget: actual footprint + compiler headroom, capped."""
    return int(min(cap, nbytes + headroom))


_VMEM = pl.BlockSpec(memory_space=pltpu.MemorySpace.VMEM)   # whole array, no pipeline
_SMEM = pl.BlockSpec(memory_space=pltpu.MemorySpace.SMEM)   # scalar input


# --------------------------------------------------------------------- kernel bodies
def _gru_attn_kernel(seqlen_ref, emb_ref, h0_ref, enc_ref,
                     wi_ref, wh_ref, bi_ref, bh_ref,
                     wcf_ref, bc_ref,
                     concat_ref, hnew_ref, attnw_ref,
                     *, H2p):
    """Fused GRU cell + 'dot' attention + concat linear/tanh. No grid (runs once)."""
    f32 = jnp.float32
    emb = emb_ref[...]                          # (Bp, Hp)   compute dtype
    h0 = h0_ref[...]                            # (Bp, H2p)  f32
    h0_c = h0.astype(wh_ref.dtype)

    # ---- single-layer GRU cell, PyTorch gate order (r, z, n), two fused matmuls.
    gi = jnp.dot(emb, wi_ref[...], preferred_element_type=f32) + bi_ref[...]
    gh = jnp.dot(h0_c, wh_ref[...], preferred_element_type=f32) + bh_ref[...]
    r = jax.nn.sigmoid(gi[:, :H2p] + gh[:, :H2p])
    z = jax.nn.sigmoid(gi[:, H2p:2 * H2p] + gh[:, H2p:2 * H2p])
    n = jnp.tanh(gi[:, 2 * H2p:] + r * gh[:, 2 * H2p:])
    h_new = (1.0 - z) * n + z * h0              # (Bp, H2p) f32 == rnn_output

    # ---- 'dot' attention on VPU/XLU.  With q==1 a batched MXU einsum would push a
    # full H2p x Lp weight tile per batch row for a single output row (<1% MXU
    # utilization on v6e/v7x); broadcast-multiply + reduce keeps the MXU free.
    enc = enc_ref[...].astype(f32)              # (Bp, Lp, H2p)
    scores = jnp.sum(h_new[:, None, :] * enc, axis=-1)      # (Bp, Lp) lane-reduce

    # Runtime source-length mask (seq_len lives in SMEM -> no recompile per length).
    sl = seqlen_ref[0]
    lane = jax.lax.broadcasted_iota(jnp.int32, scores.shape, 1)
    scores = jnp.where(lane < sl, scores, -1e30)

    m = jnp.max(scores, axis=-1, keepdims=True)
    e = jnp.exp(scores - m)
    attn = e / jnp.sum(e, axis=-1, keepdims=True)   # exact: attn is user-visible

    # context[b, h] = sum_l attn[b, l] * enc[b, l, h]  (VPU mul + sublane reduce)
    context = jnp.sum(attn[:, :, None] * enc, axis=1)        # (Bp, H2p)

    # ---- concat linear + tanh: single fused matmul over cat([rnn_out, context]).
    cat = jnp.concatenate([h_new, context], axis=-1).astype(wcf_ref.dtype)
    concat = jnp.tanh(jnp.dot(cat, wcf_ref[...], preferred_element_type=f32)
                      + bc_ref[...])                         # (Bp, Hp)

    concat_ref[...] = concat.astype(concat_ref.dtype)
    hnew_ref[...] = h_new
    attnw_ref[...] = attn


def _proj_kernel(x_ref, w_ref, b_ref, o_ref):
    """One (Hp, TV) tile of the output projection: logits_tile = x @ W_tile + b."""
    o_ref[...] = (jnp.dot(x_ref[...], w_ref[...],
                          preferred_element_type=jnp.float32) + b_ref[...])


# -------------------------------------------------------------- one-time preparation
def preprocess_params(params, *, compute_dtype=jnp.bfloat16, v_tile=4096):
    """Hoisted out of the decode loop: fuse GRU gate weights into two wide matmul
    operands, fuse the concat weight halves, transpose for x @ W^T, pad everything
    to the (8,128) vreg grid, cast matmul operands to compute_dtype (biases f32)."""
    f32 = jnp.float32
    wd = compute_dtype
    V, H = params["embedding"].shape
    H2 = 2 * H
    Hp = _round_up(H, 128)
    H2p = _round_up(H2, 128)

    Vp = _round_up(V, 128)
    TV = min(_round_up(v_tile, 128), Vp)
    Vp = _round_up(Vp, TV)
    if Vp // TV > 1 and (Vp // TV) % 2 == 1:    # even tile count: both v7x TCs busy
        Vp += TV

    def pad2(a, r, c):
        return jnp.pad(a, ((0, r - a.shape[0]), (0, c - a.shape[1])))

    w_ih, w_hh = params["gru_w_ih"], params["gru_w_hh"]
    b_ih, b_hh = params["gru_b_ih"], params["gru_b_hh"]

    def fuse_gates_w(w, rows_p):
        # (3*H2, in) -> per-gate transpose, each padded to (rows_p, H2p), concat.
        return jnp.concatenate(
            [pad2(w[g * H2:(g + 1) * H2].T, rows_p, H2p) for g in range(3)], axis=1)

    def fuse_gates_b(b):
        return jnp.concatenate(
            [pad2(b[g * H2:(g + 1) * H2][None, :], 1, H2p) for g in range(3)], axis=1)

    wc = params["concat_w"]                     # (H, 4H): [rnn_out | context] halves
    wc_fused = jnp.concatenate([pad2(wc[:, :H2].T, H2p, Hp),
                                pad2(wc[:, H2:].T, H2p, Hp)], axis=0)   # (2*H2p, Hp)

    return {
        "embedding": jnp.pad(params["embedding"], ((0, 0), (0, Hp - H))).astype(wd),
        "wi_fused": fuse_gates_w(w_ih, Hp).astype(wd),      # (Hp,  3*H2p)
        "wh_fused": fuse_gates_w(w_hh, H2p).astype(wd),     # (H2p, 3*H2p)
        "bi": fuse_gates_b(b_ih).astype(f32),               # (1, 3*H2p)
        "bh": fuse_gates_b(b_hh).astype(f32),                # (1, 3*H2p)
        "wc_fused": wc_fused.astype(wd),                    # (2*H2p, Hp)
        "bc": pad2(params["concat_b"][None, :], 1, Hp).astype(f32),
        "wo_t": pad2(params["out_w"].T, Hp, Vp).astype(wd),
        "bo": pad2(params["out_b"][None, :], 1, Vp).astype(f32),
        "meta": {"H": H, "H2": H2, "V": V,
                 "Hp": Hp, "H2p": H2p, "Vp": Vp, "TV": TV, "dtype": wd},
    }


def prepare_encoder(encoder_outputs, prepped):
    """(L, B, 2H) PyTorch layout -> padded batch-major (Bp, Lp, H2p) block in the
    compute dtype.  Call ONCE per source sequence and reuse for every decode step."""
    meta = prepped["meta"]
    L, B, H2 = encoder_outputs.shape
    Bp = _round_up(B, 8)
    Lp = _round_up(L, 128)
    enc = jnp.transpose(encoder_outputs, (1, 0, 2))           # once per sequence
    enc = jnp.pad(enc, ((0, Bp - B), (0, Lp - L), (0, meta["H2p"] - H2)))
    return enc.astype(meta["dtype"])


# -------------------------------------------------------------------- decoder step
def decoder_step(input_seq, last_hidden, enc_prepped, seq_len, prepped):
    """One decode step with pre-prepared weights + encoder block.  seq_len is fed to
    the kernel as a runtime SMEM scalar (the wrapper's final attn slice needs a
    static length; pass the padded result through if seq_len is traced)."""
    meta = prepped["meta"]
    H2, V = meta["H2"], meta["V"]
    Hp, H2p, Vp, TV = meta["Hp"], meta["H2p"], meta["Vp"], meta["TV"]
    wd = meta["dtype"]
    f32 = jnp.float32
    wd_is = jnp.dtype(wd).itemsize

    B = input_seq.shape[0]
    Bp, Lp, _ = enc_prepped.shape

    # Real embedding gather (O(B*H)) at the XLA level; dropout is identity (eval).
    embedded = jnp.take(prepped["embedding"], input_seq, axis=0)       # (B, Hp)
    embedded = jnp.pad(embedded, ((0, Bp - B), (0, 0)))
    h0 = jnp.pad(last_hidden[0].astype(f32), ((0, Bp - B), (0, H2p - H2)))
    seq_arr = jnp.asarray(seq_len, dtype=jnp.int32).reshape((1,))

    ins = (seq_arr, embedded, h0, enc_prepped,
           prepped["wi_fused"], prepped["wh_fused"],
           prepped["bi"], prepped["bh"],
           prepped["wc_fused"], prepped["bc"])

    # Kernel 1 footprint: single-buffered inputs + outputs + f32 attention temporaries.
    k1_bytes = (sum(int(x.size) * x.dtype.itemsize for x in ins[1:])
                + Bp * Hp * wd_is + Bp * H2p * 4 + Bp * Lp * 4
                + 3 * Bp * Lp * H2p * 4)

    concat_out, h_new, attn_w = pl.pallas_call(
        functools.partial(_gru_attn_kernel, H2p=H2p),
        out_shape=(jax.ShapeDtypeStruct((Bp, Hp), wd),      # concat_output
                   jax.ShapeDtypeStruct((Bp, H2p), f32),    # new hidden state
                   jax.ShapeDtypeStruct((Bp, Lp), f32)),    # attention weights
        in_specs=[_SMEM] + [_VMEM] * (len(ins) - 1),
        out_specs=(_VMEM, _VMEM, _VMEM),
        compiler_params=pltpu.CompilerParams(
            vmem_limit_bytes=_vmem_limit(k1_bytes)),
    )(*ins)

    # Vocab-sized output projection: stream (Hp, TV) weight tiles, double-buffered
    # by BlockSpec, "parallel" axis (shards across both TensorCores on v7x).
    k2_bytes = 2 * (Bp * Hp * wd_is          # activations (block-constant)
                    + Hp * TV * wd_is        # streamed weight tile
                    + 8 * TV * 4             # bias tile (sublane-padded)
                    + Bp * TV * 4)           # output tile
    logits_pad = pl.pallas_call(
        _proj_kernel,
        out_shape=jax.ShapeDtypeStruct((Bp, Vp), f32),
        grid=(Vp // TV,),
        in_specs=[pl.BlockSpec((Bp, Hp), lambda j: (0, 0)),   # block-constant
                  pl.BlockSpec((Hp, TV), lambda j: (0, j)),   # streamed weight tiles
                  pl.BlockSpec((1, TV), lambda j: (0, j))],
        out_specs=pl.BlockSpec((Bp, TV), lambda j: (0, j)),
        compiler_params=pltpu.CompilerParams(
            dimension_semantics=("parallel",),
            vmem_limit_bytes=_vmem_limit(k2_bytes)),
    )(concat_out, prepped["wo_t"], prepped["bo"])

    # Restore PyTorch output conventions (strip padding).
    logits = logits_pad[:B, :V]
    hidden = h_new[:B, :H2][None, :, :]                # (1, B, 2H)
    attn_weights = attn_w[:B, :seq_len][:, None, :]    # (B, 1, L)
    return logits, hidden, attn_weights


def luong_attn_decoder_forward(input_seq, last_hidden, encoder_outputs, prepped):
    """Drop-in equivalent of LuongAttnDecoderRNN.forward.  In a decode loop, call
    prepare_encoder() once outside the loop and use decoder_step() directly."""
    enc_prepped = prepare_encoder(encoder_outputs, prepped)
    return decoder_step(input_seq, last_hidden, enc_prepped,
                        encoder_outputs.shape[0], prepped)


# ------------------------------------------------------------------ test scaffolding
def init_params(key, hidden_size, output_size):
    H, V = hidden_size, output_size
    ks = jax.random.split(key, 8)
    s = 0.1
    return {
        "embedding": jax.random.normal(ks[0], (V, H), jnp.float32) * s,
        "gru_w_ih":  jax.random.normal(ks[1], (6 * H, H), jnp.float32) * s,
        "gru_w_hh":  jax.random.normal(ks[2], (6 * H, 2 * H), jnp.float32) * s,
        "gru_b_ih":  jax.random.normal(ks[3], (6 * H,), jnp.float32) * s,
        "gru_b_hh":  jax.random.normal(ks[4], (6 * H,), jnp.float32) * s,
        "concat_w":  jax.random.normal(ks[5], (H, 4 * H), jnp.float32) * s,
        "concat_b":  jnp.zeros((H,), jnp.float32),
        "out_w":     jax.random.normal(ks[6], (V, H), jnp.float32) * s,
        "out_b":     jnp.zeros((V,), jnp.float32),
    }


def _reference_forward(input_seq, last_hidden, encoder_outputs, params):
    """Pure-JAX f32 reference mirroring the PyTorch semantics (eval mode)."""
    H2 = last_hidden.shape[-1]
    emb = params["embedding"][input_seq]
    h0 = last_hidden[0]
    gi = emb @ params["gru_w_ih"].T + params["gru_b_ih"]
    gh = h0 @ params["gru_w_hh"].T + params["gru_b_hh"]
    r = jax.nn.sigmoid(gi[:, :H2] + gh[:, :H2])
    z = jax.nn.sigmoid(gi[:, H2:2 * H2] + gh[:, H2:2 * H2])
    n = jnp.tanh(gi[:, 2 * H2:] + r * gh[:, 2 * H2:])
    h_new = (1 - z) * n + z * h0
    scores = jnp.einsum("bh,lbh->bl", h_new, encoder_outputs)
    attn_w = jax.nn.softmax(scores, axis=-1)
    context = jnp.einsum("bl,lbh->bh", attn_w, encoder_outputs)
    cat = jnp.concatenate([h_new, context], axis=1)
    co = jnp.tanh(cat @ params["concat_w"].T + params["concat_b"])
    logits = co @ params["out_w"].T + params["out_b"]
    return logits, h_new[None], attn_w[:, None, :]


if __name__ == "__main__":
    B, H, V, L = 2, 32, 64, 8        # batch, hidden_size, output_size(vocab), max_len
    key = jax.random.PRNGKey(0)
    kp, k1, k2, k3 = jax.random.split(key, 4)

    params = init_params(kp, H, V)
    input_seq = jax.random.randint(k1, (B,), 0, V, dtype=jnp.int32)
    last_hidden = jax.random.normal(k2, (1, B, 2 * H), jnp.float32)
    encoder_outputs = jax.random.normal(k3, (L, B, 2 * H), jnp.float32)

    ref_logits, ref_hidden, ref_attn = _reference_forward(
        input_seq, last_hidden, encoder_outputs, params)

    # ---- exact-parity path (f32 matmul operands, exact softmax divide) ----------
    prepped_f32 = preprocess_params(params, compute_dtype=jnp.float32)
    out = luong_attn_decoder_forward(input_seq, last_hidden, encoder_outputs,
                                     prepped_f32)
    logits, hidden, attn_weights = jax.block_until_ready(out)
    assert logits.shape == (B, V) and hidden.shape == (1, B, 2 * H)
    assert attn_weights.shape == (B, 1, L)
    assert jnp.allclose(logits, ref_logits, atol=1e-4, rtol=1e-4)
    assert jnp.allclose(hidden, ref_hidden, atol=1e-4, rtol=1e-4)
    assert jnp.allclose(attn_weights, ref_attn, atol=1e-4, rtol=1e-4)

    # ---- fast path (bf16 matmul operands, f32 accumulation) ---------------------
    prepped_bf16 = preprocess_params(params, compute_dtype=jnp.bfloat16)
    enc_prepped = prepare_encoder(encoder_outputs, prepped_bf16)  # hoisted per-seq
    out = decoder_step(input_seq, last_hidden, enc_prepped, L, prepped_bf16)
    logits_b, hidden_b, attn_b = jax.block_until_ready(out)
    assert logits_b.shape == (B, V) and hidden_b.shape == (1, B, 2 * H)
    assert attn_b.shape == (B, 1, L)
    assert jnp.allclose(logits_b, ref_logits, atol=5e-2, rtol=5e-2)
    assert jnp.allclose(hidden_b, ref_hidden, atol=5e-2, rtol=5e-2)
    assert jnp.allclose(attn_b, ref_attn, atol=5e-2, rtol=5e-2)

    print("KERNEL_OK")
</pallas_src>

<mosaic_0001>
module attributes {stable_mosaic.version = 11 : i64} {
  func.func @_gru_attn_kernel(%arg0: memref<1xi32, #tpu.memory_space<smem>>, %arg1: memref<8x128xf32, #tpu.memory_space<vmem>>, %arg2: memref<8x128xf32, #tpu.memory_space<vmem>>, %arg3: memref<8x128x128xf32, #tpu.memory_space<vmem>>, %arg4: memref<128x384xf32, #tpu.memory_space<vmem>>, %arg5: memref<128x384xf32, #tpu.memory_space<vmem>>, %arg6: memref<1x384xf32, #tpu.memory_space<vmem>>, %arg7: memref<1x384xf32, #tpu.memory_space<vmem>>, %arg8: memref<256x128xf32, #tpu.memory_space<vmem>>, %arg9: memref<1x128xf32, #tpu.memory_space<vmem>>, %arg10: memref<8x128xf32, #tpu.memory_space<vmem>>, %arg11: memref<8x128xf32, #tpu.memory_space<vmem>>, %arg12: memref<8x128xf32, #tpu.memory_space<vmem>>) attributes {dimension_semantics = [], scalar_prefetch = 0 : i64, scratch_operands = 0 : i64, tpu.core_type = #tpu.core_type<tc>} {
    %c0 = arith.constant 0 : index
    %c0_0 = arith.constant 0 : index
    %0 = vector.load %arg1[%c0, %c0_0] : memref<8x128xf32, #tpu.memory_space<vmem>>, vector<8x128xf32>
    %c0_1 = arith.constant 0 : index
    %c0_2 = arith.constant 0 : index
    %1 = vector.load %arg2[%c0_1, %c0_2] : memref<8x128xf32, #tpu.memory_space<vmem>>, vector<8x128xf32>
    %c0_3 = arith.constant 0 : index
    %c0_4 = arith.constant 0 : index
    %2 = vector.load %arg4[%c0_3, %c0_4] : memref<128x384xf32, #tpu.memory_space<vmem>>, vector<128x384xf32>
    %cst = arith.constant dense<0.000000e+00> : vector<8x384xf32>
    %3 = tpu.matmul %0, %2, %cst {dimension_numbers = #tpu.dot_dimension_numbers<[1], [0], [0], [1], [0, 0, 1, 1], [], []>} : vector<8x128xf32>, vector<128x384xf32>, vector<8x384xf32> -> vector<8x384xf32>
    %c0_5 = arith.constant 0 : index
    %c0_6 = arith.constant 0 : index
    %4 = vector.load %arg6[%c0_5, %c0_6] : memref<1x384xf32, #tpu.memory_space<vmem>>, vector<1x384xf32>
    %5 = vector.broadcast %4 : vector<1x384xf32> to vector<8x384xf32>
    %6 = arith.addf %3, %5 : vector<8x384xf32>
    %c0_7 = arith.constant 0 : index
    %c0_8 = arith.constant 0 : index
    %7 = vector.load %arg5[%c0_7, %c0_8] : memref<128x384xf32, #tpu.memory_space<vmem>>, vector<128x384xf32>
    %cst_9 = arith.constant dense<0.000000e+00> : vector<8x384xf32>
    %8 = tpu.matmul %1, %7, %cst_9 {dimension_numbers = #tpu.dot_dimension_numbers<[1], [0], [0], [1], [0, 0, 1, 1], [], []>} : vector<8x128xf32>, vector<128x384xf32>, vector<8x384xf32> -> vector<8x384xf32>
    %c0_10 = arith.constant 0 : index
    %c0_11 = arith.constant 0 : index
    %9 = vector.load %arg7[%c0_10, %c0_11] : memref<1x384xf32, #tpu.memory_space<vmem>>, vector<1x384xf32>
    %10 = vector.broadcast %9 : vector<1x384xf32> to vector<8x384xf32>
    %11 = arith.addf %8, %10 : vector<8x384xf32>
    %12 = vector.extract_strided_slice %6 {offsets = [0, 0], sizes = [8, 128], strides = [1, 1]} : vector<8x384xf32> to vector<8x128xf32>
    %13 = vector.extract_strided_slice %11 {offsets = [0, 0], sizes = [8, 128], strides = [1, 1]} : vector<8x384xf32> to vector<8x128xf32>
    %14 = arith.addf %12, %13 : vector<8x128xf32>
    %15 = arith.negf %14 : vector<8x128xf32>
    %16 = math.exp %15 : vector<8x128xf32>
    %cst_12 = arith.constant 1.000000e+00 : f32
    %17 = vector.broadcast %cst_12 : f32 to vector<8x128xf32>
    %18 = arith.addf %17, %16 : vector<8x128xf32>
    %19 = arith.divf %17, %18 : vector<8x128xf32>
    %20 = vector.extract_strided_slice %6 {offsets = [0, 128], sizes = [8, 128], strides = [1, 1]} : vector<8x384xf32> to vector<8x128xf32>
    %21 = vector.extract_strided_slice %11 {offsets = [0, 128], sizes = [8, 128], strides = [1, 1]} : vector<8x384xf32> to vector<8x128xf32>
    %22 = arith.addf %20, %21 : vector<8x128xf32>
    %23 = arith.negf %22 : vector<8x128xf32>
    %24 = math.exp %23 : vector<8x128xf32>
    %cst_13 = arith.constant 1.000000e+00 : f32
    %25 = vector.broadcast %cst_13 : f32 to vector<8x128xf32>
    %26 = arith.addf %25, %24 : vector<8x128xf32>
    %27 = arith.divf %25, %26 : vector<8x128xf32>
    %28 = vector.extract_strided_slice %6 {offsets = [0, 256], sizes = [8, 128], strides = [1, 1]} : vector<8x384xf32> to vector<8x128xf32>
    %29 = vector.extract_strided_slice %11 {offsets = [0, 256], sizes = [8, 128], strides = [1, 1]} : vector<8x384xf32> to vector<8x128xf32>
    %30 = arith.mulf %19, %29 : vector<8x128xf32>
    %31 = arith.addf %28, %30 : vector<8x128xf32>
    %32 = math.tanh %31 : vector<8x128xf32>
    %cst_14 = arith.constant 1.000000e+00 : f32
    %33 = vector.broadcast %cst_14 : f32 to vector<8x128xf32>
    %34 = arith.subf %33, %27 : vector<8x128xf32>
    %35 = arith.mulf %34, %32 : vector<8x128xf32>
    %36 = arith.mulf %27, %1 : vector<8x128xf32>
    %37 = arith.addf %35, %36 : vector<8x128xf32>
    %c0_15 = arith.constant 0 : index
    %c0_16 = arith.constant 0 : index
    %c0_17 = arith.constant 0 : index
    %38 = vector.load %arg3[%c0_15, %c0_16, %c0_17] : memref<8x128x128xf32, #tpu.memory_space<vmem>>, vector<8x128x128xf32>
    %39 = vector.shape_cast %37 : vector<8x128xf32> to vector<8x1x128xf32>
    %40 = vector.broadcast %39 : vector<8x1x128xf32> to vector<8x128x128xf32>
    %41 = arith.mulf %40, %38 : vector<8x128x128xf32>
    %cst_18 = arith.constant dense<0.000000e+00> : vector<8x128xf32>
    %42 = vector.multi_reduction <add>, %41, %cst_18 [2] : vector<8x128x128xf32> to vector<8x128xf32>
    %c0_19 = arith.constant 0 : index
    %43 = memref.load %arg0[%c0_19] : memref<1xi32, #tpu.memory_space<smem>>
    %44 = tpu.iota {dimensions = array<i32: 1>} : vector<8x128xi32>
    %45 = vector.broadcast %43 : i32 to vector<8x128xi32>
    %46 = arith.cmpi slt, %44, %45 : vector<8x128xi32>
    %cst_20 = arith.constant -1.000000e+30 : f32
    %47 = vector.broadcast %cst_20 : f32 to vector<8x128xf32>
    %48 = arith.select %46, %42, %47 : vector<8x128xi1>, vector<8x128xf32>
    %cst_21 = arith.constant dense<0xFF800000> : vector<8xf32>
    %49 = vector.multi_reduction <maximumf>, %48, %cst_21 [1] : vector<8x128xf32> to vector<8xf32>
    %50 = vector.shape_cast %49 : vector<8xf32> to vector<8x1xf32>
    %51 = vector.broadcast %50 : vector<8x1xf32> to vector<8x128xf32>
    %52 = arith.subf %48, %51 : vector<8x128xf32>
    %53 = math.exp %52 : vector<8x128xf32>
    %cst_22 = arith.constant dense<0.000000e+00> : vector<8xf32>
    %54 = vector.multi_reduction <add>, %53, %cst_22 [1] : vector<8x128xf32> to vector<8xf32>
    %55 = vector.shape_cast %54 : vector<8xf32> to vector<8x1xf32>
    %56 = vector.broadcast %55 : vector<8x1xf32> to vector<8x128xf32>
    %57 = arith.divf %53, %56 : vector<8x128xf32>
    %58 = vector.shape_cast %57 : vector<8x128xf32> to vector<8x128x1xf32>
    %59 = vector.broadcast %58 : vector<8x128x1xf32> to vector<8x128x128xf32>
    %60 = arith.mulf %59, %38 : vector<8x128x128xf32>
    %cst_23 = arith.constant dense<0.000000e+00> : vector<8x128xf32>
    %61 = vector.multi_reduction <add>, %60, %cst_23 [1] : vector<8x128x128xf32> to vector<8x128xf32>
    %62 = tpu.concatenate %37, %61 in 1 : vector<8x128xf32>, vector<8x128xf32> -> vector<8x256xf32>
    %c0_24 = arith.constant 0 : index
    %c0_25 = arith.constant 0 : index
    %63 = vector.load %arg8[%c0_24, %c0_25] : memref<256x128xf32, #tpu.memory_space<vmem>>, vector<256x128xf32>
    %cst_26 = arith.constant dense<0.000000e+00> : vector<8x128xf32>
    %64 = tpu.matmul %62, %63, %cst_26 {dimension_numbers = #tpu.dot_dimension_numbers<[1], [0], [0], [1], [0, 0, 1, 1], [], []>} : vector<8x256xf32>, vector<256x128xf32>, vector<8x128xf32> -> vector<8x128xf32>
    %c0_27 = arith.constant 0 : index
    %c0_28 = arith.constant 0 : index
    %65 = vector.load %arg9[%c0_27, %c0_28] : memref<1x128xf32, #tpu.memory_space<vmem>>, vector<1x128xf32>
    %66 = vector.broadcast %65 : vector<1x128xf32> to vector<8x128xf32>
    %67 = arith.addf %64, %66 : vector<8x128xf32>
    %68 = math.tanh %67 : vector<8x128xf32>
    %c0_29 = arith.constant 0 : index
    %c0_30 = arith.constant 0 : index
    %69 = vector.load %arg10[%c0_29, %c0_30] : memref<8x128xf32, #tpu.memory_space<vmem>>, vector<8x128xf32>
    tpu.vector_store %arg10[%c0_29, %c0_30], %68 {strides = array<i32>} : memref<8x128xf32, #tpu.memory_space<vmem>>, vector<8x128xf32>,
    %c0_31 = arith.constant 0 : index
    %c0_32 = arith.constant 0 : index
    %70 = vector.load %arg11[%c0_31, %c0_32] : memref<8x128xf32, #tpu.memory_space<vmem>>, vector<8x128xf32>
    tpu.vector_store %arg11[%c0_31, %c0_32], %37 {strides = array<i32>} : memref<8x128xf32, #tpu.memory_space<vmem>>, vector<8x128xf32>,
    %c0_33 = arith.constant 0 : index
    %c0_34 = arith.constant 0 : index
    %71 = vector.load %arg12[%c0_33, %c0_34] : memref<8x128xf32, #tpu.memory_space<vmem>>, vector<8x128xf32>
    tpu.vector_store %arg12[%c0_33, %c0_34], %57 {strides = array<i32>} : memref<8x128xf32, #tpu.memory_space<vmem>>, vector<8x128xf32>,
    return
  }
}

</mosaic_0001>

<llo_original>
// kernel: tpu_custom_call.1
$region0: #{tpu_custom_call.1}
  #allocation0 [shape = 'u32[]', space=smem, size = 0x4, offset = 0x4, fixed_abs, tag = 'smem constant byte address 0x4 - core index']
  #allocation1 [shape = 'u32[144,128]{1,0:T(1,128)}', space=vmem, size = 0x12000, scoped, tag = 'internal scratch']
  #allocation2 [shape = 's32[1]{0:T(128)S(6)}', space=smem, size = 0x200, scoped, tag = 'scoped memory for tpu_custom_call.1']
  %s0 = inlined_call_operand.<no memory space> [shape: s32[1], index: 0, kind: input, shape index: {}]
  %s1 = inlined_call_operand.hbm [shape: f32[8,128], index: 1, kind: input, shape index: {}]
  %s2 = inlined_call_operand.hbm [shape: f32[8,128], index: 2, kind: input, shape index: {}]
  %s3 = inlined_call_operand.hbm [shape: f32[8,128,128], index: 3, kind: input, shape index: {}]
  %s4 = inlined_call_operand.hbm [shape: f32[128,384], index: 4, kind: input, shape index: {}]
  %s5 = inlined_call_operand.hbm [shape: f32[128,384], index: 5, kind: input, shape index: {}]
  %s6 = inlined_call_operand.vmem [shape: f32[1,384], index: 6, kind: input, shape index: {}]
  %s7 = inlined_call_operand.vmem [shape: f32[1,384], index: 7, kind: input, shape index: {}]
  %s8 = inlined_call_operand.hbm [shape: f32[256,128], index: 8, kind: input, shape index: {}]
  %s9 = inlined_call_operand.vmem [shape: f32[1,128], index: 9, kind: input, shape index: {}]
  %s10 = inlined_call_operand.hbm [shape: f32[8,128], index: 10, kind: output, shape index: {0}]
  %s11 = inlined_call_operand.hbm [shape: f32[8,128], index: 11, kind: output, shape index: {1}]
  %s12 = inlined_call_operand.hbm [shape: f32[8,128], index: 12, kind: output, shape index: {2}]
  %13 = xla_tuple %s10, %s11, %s12
  %s14 = sld [smem:[#allocation0]]
  $region90: #{tpu_custom_call.1} parent=0
    _
  %s16 = ssub.s32 1, %s14
  %s17 = scalar_select 0, %s16, %s14
  %18 = sst [smem:[#allocation2]] %s0
  $region1: #{tpu_custom_call.1} parent=0
    #allocation3 [shape = 'u8[4096]{0}', space=vmem, size = 0x1000, scoped, tag = 'input window, operand 1, single buffered']
    #allocation4 [shape = 's32[1]{0}', space=sflag, size = 0x4, scoped, tag = 'scoped memory for tpu_custom_call.1']
    #allocation5 [shape = 's32[1]{0}', space=sflag, size = 0x4, scoped, tag = 'scoped memory for tpu_custom_call.1']
    #allocation6 [shape = 'u8[4096]{0}', space=vmem, size = 0x1000, scoped, tag = 'input window, operand 2, single buffered']
    #allocation7 [shape = 's32[1]{0}', space=sflag, size = 0x4, scoped, tag = 'scoped memory for tpu_custom_call.1']
    #allocation8 [shape = 'u8[524288]{0}', space=vmem, size = 0x80000, scoped, tag = 'input window, operand 3, single buffered']
    #allocation9 [shape = 'u8[196608]{0}', space=vmem, size = 0x30000, scoped, tag = 'input window, operand 4, single buffered']
    #allocation10 [shape = 's32[1]{0}', space=sflag, size = 0x4, scoped, tag = 'scoped memory for tpu_custom_call.1']
    #allocation11 [shape = 'u8[196608]{0}', space=vmem, size = 0x30000, scoped, tag = 'input window, operand 5, single buffered']
    #allocation12 [shape = 'u8[131072]{0}', space=vmem, size = 0x20000, scoped, tag = 'input window, operand 8, single buffered']
    #allocation13 [shape = 's32[1]{0}', space=sflag, size = 0x4, scoped, tag = 'scoped memory for tpu_custom_call.1']
    #allocation14 [shape = 'u8[4096]{0}', space=vmem, size = 0x1000, scoped, tag = 'output window, operand 0, single buffered']
    #allocation15 [shape = 'u8[4096]{0}', space=vmem, size = 0x1000, scoped, tag = 'output window, operand 1, single buffered']
    #allocation16 [shape = 's32[1]{0}', space=sflag, size = 0x4, scoped, tag = 'scoped memory for tpu_custom_call.1']
    #allocation17 [shape = 'u8[4096]{0}', space=vmem, size = 0x1000, scoped, tag = 'output window, operand 2, single buffered']
    %19 = vsyncpa [#allocation4], 0
    %20 = vsyncpa [#allocation7], 0
    %21 = vsyncpa [#allocation10], 0
    %22 = vsyncpa [#allocation13], 0
    %23 = vsyncpa [#allocation5], 0
    %24 = vsyncpa [#allocation16], 0
    // Predicated region
    $region2: #{tpu_custom_call.1} parent=1 // pred_check
      _
    $region3: #{tpu_custom_call.1} parent=1 // pred_check_branch
      %26 = sbr.rel (0) target = $region5
    $region4: #{tpu_custom_call.1} parent=1 // pred_region
      _
    $region5: #{tpu_custom_call.1} parent=1 // pred_fallthru
      _
    // Predicated region
    $region6: #{tpu_custom_call.1} parent=1 // pred_check
      _
    $region7: #{tpu_custom_call.1} parent=1 // pred_check_branch
      %28 = sbr.rel (0) target = $region9
    $region8: #{tpu_custom_call.1} parent=1 // pred_region
      %s30 = ssub.s32 128, 128
      %31 = vsyncadd [#allocation4], %s30
      %s33 = sshll.u32 [#allocation3], 4
      %s34 = int_to_ptr.vmem [resolvable:$true] %s33
      %36 = dma.hbm_to_vmem [thread:$0]  %s1, 128, %s34, [#allocation4]
    $region9: #{tpu_custom_call.1} parent=1 // pred_fallthru
      _
    // Predicated region
    $region10: #{tpu_custom_call.1} parent=1 // pred_check
      _
    $region11: #{tpu_custom_call.1} parent=1 // pred_check_branch
      %38 = sbr.rel (0) target = $region13
    $region12: #{tpu_custom_call.1} parent=1 // pred_region
      %s40 = ssub.s32 128, 128
      %41 = vsyncadd [#allocation7], %s40
      %s43 = sshll.u32 [#allocation6], 4
      %s44 = int_to_ptr.vmem [resolvable:$true] %s43
      %46 = dma.hbm_to_vmem [thread:$0]  %s2, 128, %s44, [#allocation7]
    $region13: #{tpu_custom_call.1} parent=1 // pred_fallthru
      _
    // Predicated region
    $region14: #{tpu_custom_call.1} parent=1 // pred_check
      _
    $region15: #{tpu_custom_call.1} parent=1 // pred_check_branch
      %48 = sbr.rel (0) target = $region17
    $region16: #{tpu_custom_call.1} parent=1 // pred_region
      %s50 = ssub.s32 16384, 16384
      %51 = vsyncadd [#allocation7], %s50
      %s52 = sshll.u32 [#allocation8], 4
      %s53 = int_to_ptr.vmem [resolvable:$true] %s52
      %58 = dma.hbm_to_vmem [thread:$0]  %s3, 16384, %s53, [#allocation7], 128, 128, 8
    $region17: #{tpu_custom_call.1} parent=1 // pred_fallthru
      _
    // Predicated region
    $region18: #{tpu_custom_call.1} parent=1 // pred_check
      _
    $region19: #{tpu_custom_call.1} parent=1 // pred_check_branch
      %60 = sbr.rel (0) target = $region21
    $region20: #{tpu_custom_call.1} parent=1 // pred_region
      %s62 = ssub.s32 6144, 6144
      %63 = vsyncadd [#allocation10], %s62
      %s64 = sshll.u32 [#allocation9], 4
      %s65 = int_to_ptr.vmem [resolvable:$true] %s64
      %70 = dma.hbm_to_vmem [thread:$0]  %s4, 6144, %s65, [#allocation10], 384, 384, 24
    $region21: #{tpu_custom_call.1} parent=1 // pred_fallthru
      _
    // Predicated region
    $region22: #{tpu_custom_call.1} parent=1 // pred_check
      _
    $region23: #{tpu_custom_call.1} parent=1 // pred_check_branch
      %72 = sbr.rel (0) target = $region25
    $region24: #{tpu_custom_call.1} parent=1 // pred_region
      %s74 = ssub.s32 6144, 6144
      %75 = vsyncadd [#allocation10], %s74
      %s76 = sshll.u32 [#allocation11], 4
      %s77 = int_to_ptr.vmem [resolvable:$true] %s76
      %82 = dma.hbm_to_vmem [thread:$0]  %s5, 6144, %s77, [#allocation10], 384, 384, 24
    $region25: #{tpu_custom_call.1} parent=1 // pred_fallthru
      _
    // Predicated region
    $region26: #{tpu_custom_call.1} parent=1 // pred_check
      _
    $region27: #{tpu_custom_call.1} parent=1 // pred_check_branch
      %84 = sbr.rel (0) target = $region29
    $region28: #{tpu_custom_call.1} parent=1 // pred_region
      _
    $region29: #{tpu_custom_call.1} parent=1 // pred_fallthru
      _
    // Predicated region
    $region30: #{tpu_custom_call.1} parent=1 // pred_check
      _
    $region31: #{tpu_custom_call.1} parent=1 // pred_check_branch
      %86 = sbr.rel (0) target = $region33
    $region32: #{tpu_custom_call.1} parent=1 // pred_region
      _
    $region33: #{tpu_custom_call.1} parent=1 // pred_fallthru
      _
    // Predicated region
    $region34: #{tpu_custom_call.1} parent=1 // pred_check
      _
    $region35: #{tpu_custom_call.1} parent=1 // pred_check_branch
      %88 = sbr.rel (0) target = $region37
    $region36: #{tpu_custom_call.1} parent=1 // pred_region
      %s90 = ssub.s32 4096, 4096
      %91 = vsyncadd [#allocation13], %s90
      %s92 = sshll.u32 [#allocation12], 4
      %s93 = int_to_ptr.vmem [resolvable:$true] %s92
      %98 = dma.hbm_to_vmem [thread:$0]  %s8, 4096, %s93, [#allocation13], 128, 128, 8
    $region37: #{tpu_custom_call.1} parent=1 // pred_fallthru
      _
    // Predicated region
    $region38: #{tpu_custom_call.1} parent=1 // pred_check
      _
    $region39: #{tpu_custom_call.1} parent=1 // pred_check_branch
      %100 = sbr.rel (0) target = $region41
    $region40: #{tpu_custom_call.1} parent=1 // pred_region
      _
    $region41: #{tpu_custom_call.1} parent=1 // pred_fallthru
      _
    // Predicated region
    $region42: #{tpu_custom_call.1} parent=1 // pred_check
      _
    $region43: #{tpu_custom_call.1} parent=1 // pred_check_branch
      %102 = sbr.rel (0) target = $region45
    $region44: #{tpu_custom_call.1} parent=1 // pred_region
      %103 = dma.done [#allocation4], 128
    $region45: #{tpu_custom_call.1} parent=1 // pred_fallthru
      _
    // Predicated region
    $region46: #{tpu_custom_call.1} parent=1 // pred_check
      _
    $region47: #{tpu_custom_call.1} parent=1 // pred_check_branch
      %105 = sbr.rel (0) target = $region49
    $region48: #{tpu_custom_call.1} parent=1 // pred_region
      %106 = dma.done [#allocation7], 128
    $region49: #{tpu_custom_call.1} parent=1 // pred_fallthru
      _
    // Predicated region
    $region50: #{tpu_custom_call.1} parent=1 // pred_check
      _
    $region51: #{tpu_custom_call.1} parent=1 // pred_check_branch
      %108 = sbr.rel (0) target = $region53
    $region52: #{tpu_custom_call.1} parent=1 // pred_region
      %109 = dma.done [#allocation7], 16384
    $region53: #{tpu_custom_call.1} parent=1 // pred_fallthru
      _
    // Predicated region
    $region54: #{tpu_custom_call.1} parent=1 // pred_check
      _
    $region55: #{tpu_custom_call.1} parent=1 // pred_check_branch
      %111 = sbr.rel (0) target = $region57
    $region56: #{tpu_custom_call.1} parent=1 // pred_region
      %112 = dma.done [#allocation10], 6144
    $region57: #{tpu_custom_call.1} parent=1 // pred_fallthru
      _
    // Predicated region
    $region58: #{tpu_custom_call.1} parent=1 // pred_check
      _
    $region59: #{tpu_custom_call.1} parent=1 // pred_check_branch
      %114 = sbr.rel (0) target = $region61
    $region60: #{tpu_custom_call.1} parent=1 // pred_region
      %115 = dma.done [#allocation10], 6144
    $region61: #{tpu_custom_call.1} parent=1 // pred_fallthru
      _
    // Predicated region
    $region62: #{tpu_custom_call.1} parent=1 // pred_check
      _
    $region63: #{tpu_custom_call.1} parent=1 // pred_check_branch
      %117 = sbr.rel (0) target = $region65
    $region64: #{tpu_custom_call.1} parent=1 // pred_region
      %118 = dma.done [#allocation13], 4096
    $region65: #{tpu_custom_call.1} parent=1 // pred_fallthru
      _
    %v119 = vld [vmem:[#allocation3] sm:$0xff]
    %v120 = vld [vmem:[#allocation6] sm:$0xff]
    %v121 = vld [vmem:[#allocation9] sm:$0xff]
    %v122 = vld [vmem:[#allocation9 + $0x8] sm:$0xff]
    %v123 = vld [vmem:[#allocation9 + $0x10] sm:$0xff]
    %v124 = vld [vmem:[#allocation9 + $0x18] sm:$0xff]
    %v125 = vld [vmem:[#allocation9 + $0x20] sm:$0xff]
    %v126 = vld [vmem:[#allocation9 + $0x28] sm:$0xff]
    %v127 = vld [vmem:[#allocation9 + $0x30] sm:$0xff]
    %v128 = vld [vmem:[#allocation9 + $0x38] sm:$0xff]
    %v129 = vld [vmem:[#allocation9 + $0x40] sm:$0xff]
    %v130 = vld [vmem:[#allocation9 + $0x48] sm:$0xff]
    %v131 = vld [vmem:[#allocation9 + $0x50] sm:$0xff]
    %v132 = vld [vmem:[#allocation9 + $0x58] sm:$0xff]
    %v133 = vld [vmem:[#allocation9 + $0x60] sm:$0xff]
    %v134 = vld [vmem:[#allocation9 + $0x68] sm:$0xff]
    %v135 = vld [vmem:[#allocation9 + $0x70] sm:$0xff]
    %v136 = vld [vmem:[#allocation9 + $0x78] sm:$0xff]
    %v137 = vld [vmem:[#allocation9 + $0x80] sm:$0xff]
    %v138 = vld [vmem:[#allocation9 + $0x88] sm:$0xff]
    %v139 = vld [vmem:[#allocation9 + $0x90] sm:$0xff]
    %v140 = vld [vmem:[#allocation9 + $0x98] sm:$0xff]
    %v141 = vld [vmem:[#allocation9 + $0xa0] sm:$0xff]
    %v142 = vld [vmem:[#allocation9 + $0xa8] sm:$0xff]
    %v143 = vld [vmem:[#allocation9 + $0xb0] sm:$0xff]
    %v144 = vld [vmem:[#allocation9 + $0xb8] sm:$0xff]
    %v145 = vld [vmem:[#allocation9 + $0xc0] sm:$0xff]
    %v146 = vld [vmem:[#allocation9 + $0xc8] sm:$0xff]
    %v147 = vld [vmem:[#allocation9 + $0xd0] sm:$0xff]
    %v148 = vld [vmem:[#allocation9 + $0xd8] sm:$0xff]
    %v149 = vld [vmem:[#allocation9 + $0xe0] sm:$0xff]
    %v150 = vld [vmem:[#allocation9 + $0xe8] sm:$0xff]
    %v151 = vld [vmem:[#allocation9 + $0xf0] sm:$0xff]
    %v152 = vld [vmem:[#allocation9 + $0xf8] sm:$0xff]
    %v153 = vld [vmem:[#allocation9 + $0x100] sm:$0xff]
    %v154 = vld [vmem:[#allocation9 + $0x108] sm:$0xff]
    %v155 = vld [vmem:[#allocation9 + $0x110] sm:$0xff]
    %v156 = vld [vmem:[#allocation9 + $0x118] sm:$0xff]
    %v157 = vld [vmem:[#allocation9 + $0x120] sm:$0xff]
    %v158 = vld [vmem:[#allocation9 + $0x128] sm:$0xff]
    %v159 = vld [vmem:[#allocation9 + $0x130] sm:$0xff]
    %v160 = vld [vmem:[#allocation9 + $0x138] sm:$0xff]
    %v161 = vld [vmem:[#allocation9 + $0x140] sm:$0xff]
    %v162 = vld [vmem:[#allocation9 + $0x148] sm:$0xff]
    %v163 = vld [vmem:[#allocation9 + $0x150] sm:$0xff]
    %v164 = vld [vmem:[#allocation9 + $0x158] sm:$0xff]
    %v165 = vld [vmem:[#allocation9 + $0x160] sm:$0xff]
    %v166 = vld [vmem:[#allocation9 + $0x168] sm:$0xff]
    %v167 = vld [vmem:[#allocation9 + $0x170] sm:$0xff]
    %v168 = vld [vmem:[#allocation9 + $0x178] sm:$0xff]
    %v169 = vld [vmem:[%s6] sm:$0x7]
    %v171 = vlaneseq
    %v172 = vshrl.u32 %v171, 7
    %v173 = vsub.s32 0, %v172
    %v174 = vrot.slane %v169, %v173
    %v175 = vlaneseq
    %v176 = vshrl.u32 %v175, 7
    %v177 = vsub.s32 1, %v176
    %v178 = vrot.slane %v169, %v177
    %v179 = vlaneseq
    %v180 = vshrl.u32 %v179, 7
    %v181 = vsub.s32 2, %v180
    %v182 = vrot.slane %v169, %v181
    %186 = vmatprep.subr.mxu0 %v167
    %187 = vmatpush1.msra.mxu0 %v166
    %188 = vmatprep.subr.mxu0 %v164
    %189 = vmatpush1.msra.mxu0 %v163
    %190 = vmatprep.subr.mxu0 %v161
    %191 = vmatpush1.msra.mxu0 %v160
    %192 = vmatprep.subr.mxu0 %v158
    %193 = vmatpush1.msra.mxu0 %v157
    %194 = vmatprep.subr.mxu0 %v155
    %195 = vmatpush1.msra.mxu0 %v154
    %196 = vmatprep.subr.mxu0 %v152
    %197 = vmatpush1.msra.mxu0 %v151
    %198 = vmatprep.subr.mxu0 %v149
    %199 = vmatpush1.msra.mxu0 %v148
    %200 = vmatprep.subr.mxu0 %v146
    %201 = vmatpush1.msra.mxu0 %v145
    %202 = vmatprep.subr.mxu0 %v143
    %203 = vmatpush1.msra.mxu0 %v142
    %204 = vmatprep.subr.mxu0 %v140
    %205 = vmatpush1.msra.mxu0 %v139
    %206 = vmatprep.subr.mxu0 %v137
    %207 = vmatpush1.msra.mxu0 %v136
    %208 = vmatprep.subr.mxu0 %v134
    %209 = vmatpush1.msra.mxu0 %v133
    %210 = vmatprep.subr.mxu0 %v131
    %211 = vmatpush1.msra.mxu0 %v130
    %212 = vmatprep.subr.mxu0 %v128
    %213 = vmatpush1.msra.mxu0 %v127
    %214 = vmatprep.subr.mxu0 %v125
    %215 = vmatpush1.msra.mxu0 %v124
    %216 = vmatprep.subr.mxu0 %v122
    %217 = vmatpush1.msra.mxu0 %v121
    %218 = vmatprep.subr.mxu0 0.0
    %219 = vmatpush2.msra.mxu0 0.0
    %220 = vmatprep.subr.mxu0 0.0
    %221 = vmatpush2.msra.mxu0 0.0
    %222 = vmatprep.subr.mxu0 0.0
    %223 = vmatpush2.msra.mxu0 0.0
    %224 = vmatprep.subr.mxu0 0.0
    %225 = vmatpush2.msra.mxu0 0.0
    %226 = vmatprep.subr.mxu0 0.0
    %227 = vmatpush2.msra.mxu0 0.0
    %228 = vmatprep.subr.mxu0 0.0
    %229 = vmatpush2.msra.mxu0 0.0
    %230 = vmatprep.subr.mxu0 0.0
    %231 = vmatpush2.msra.mxu0 0.0
    %232 = vmatprep.subr.mxu0 0.0
    %233 = vmatpush2.msra.mxu0 0.0
    %234 = vmatprep.subr.mxu0 0.0
    %235 = vmatpush2.msra.mxu0 0.0
    %236 = vmatprep.subr.mxu0 0.0
    %237 = vmatpush2.msra.mxu0 0.0
    %238 = vmatprep.subr.mxu0 0.0
    %239 = vmatpush2.msra.mxu0 0.0
    %240 = vmatprep.subr.mxu0 0.0
    %241 = vmatpush2.msra.mxu0 0.0
    %242 = vmatprep.subr.mxu0 0.0
    %243 = vmatpush2.msra.mxu0 0.0
    %244 = vmatprep.subr.mxu0 0.0
    %245 = vmatpush2.msra.mxu0 0.0
    %246 = vmatprep.subr.mxu0 0.0
    %247 = vmatpush2.msra.mxu0 0.0
    %248 = vmatprep.subr.mxu0 0.0
    %249 = vmatpush2.msra.mxu0 0.0
    %250 = vmatprep.mubr.f32.mxu0 0.0
    %251 = vmatmul.mubr.f32.gmra.mxu0 %v119
    %v252 = vpop.f32.mrf.mxu0
    %v253 = vadd.f32 %v174, %v252
    %v254 = vpop.f32.mrf.mxu0
    %v255 = vadd.f32 %v178, %v254
    %256 = vdwg.mxu0
    %257 = vmatprep.subr.mxu0 0.0
    %258 = vmatpush1.msra.mxu0 %v168
    %259 = vmatprep.subr.mxu0 0.0
    %260 = vmatpush1.msra.mxu0 %v165
    %261 = vmatprep.subr.mxu0 0.0
    %262 = vmatpush1.msra.mxu0 %v162
    %263 = vmatprep.subr.mxu0 0.0
    %264 = vmatpush1.msra.mxu0 %v159
    %265 = vmatprep.subr.mxu0 0.0
    %266 = vmatpush1.msra.mxu0 %v156
    %267 = vmatprep.subr.mxu0 0.0
    %268 = vmatpush1.msra.mxu0 %v153
    %269 = vmatprep.subr.mxu0 0.0
    %270 = vmatpush1.msra.mxu0 %v150
    %271 = vmatprep.subr.mxu0 0.0
    %272 = vmatpush1.msra.mxu0 %v147
    %273 = vmatprep.subr.mxu0 0.0
    %274 = vmatpush1.msra.mxu0 %v144
    %275 = vmatprep.subr.mxu0 0.0
    %276 = vmatpush1.msra.mxu0 %v141
    %277 = vmatprep.subr.mxu0 0.0
    %278 = vmatpush1.msra.mxu0 %v138
    %279 = vmatprep.subr.mxu0 0.0
    %280 = vmatpush1.msra.mxu0 %v135
    %281 = vmatprep.subr.mxu0 0.0
    %282 = vmatpush1.msra.mxu0 %v132
    %283 = vmatprep.subr.mxu0 0.0
    %284 = vmatpush1.msra.mxu0 %v129
    %285 = vmatprep.subr.mxu0 0.0
    %286 = vmatpush1.msra.mxu0 %v126
    %287 = vmatprep.subr.mxu0 0.0
    %288 = vmatpush1.msra.mxu0 %v123
    %289 = vmatprep.subr.mxu0 0.0
    %290 = vmatpush2.msra.mxu0 0.0
    %291 = vmatprep.subr.mxu0 0.0
    %292 = vmatpush2.msra.mxu0 0.0
    %293 = vmatprep.subr.mxu0 0.0
    %294 = vmatpush2.msra.mxu0 0.0
    %295 = vmatprep.subr.mxu0 0.0
    %296 = vmatpush2.msra.mxu0 0.0
    %297 = vmatprep.subr.mxu0 0.0
    %298 = vmatpush2.msra.mxu0 0.0
    %299 = vmatprep.subr.mxu0 0.0
    %300 = vmatpush2.msra.mxu0 0.0
    %301 = vmatprep.subr.mxu0 0.0
    %302 = vmatpush2.msra.mxu0 0.0
    %303 = vmatprep.subr.mxu0 0.0
    %304 = vmatpush2.msra.mxu0 0.0
    %305 = vmatprep.subr.mxu0 0.0
    %306 = vmatpush2.msra.mxu0 0.0
    %307 = vmatprep.subr.mxu0 0.0
    %308 = vmatpush2.msra.mxu0 0.0
    %309 = vmatprep.subr.mxu0 0.0
    %310 = vmatpush2.msra.mxu0 0.0
    %311 = vmatprep.subr.mxu0 0.0
    %312 = vmatpush2.msra.mxu0 0.0
    %313 = vmatprep.subr.mxu0 0.0
    %314 = vmatpush2.msra.mxu0 0.0
    %315 = vmatprep.subr.mxu0 0.0
    %316 = vmatpush2.msra.mxu0 0.0
    %317 = vmatprep.subr.mxu0 0.0
    %318 = vmatpush2.msra.mxu0 0.0
    %319 = vmatprep.subr.mxu0 0.0
    %320 = vmatpush2.msra.mxu0 0.0
    %321 = vmatprep.mubr.f32.mxu0 0.0
    %322 = vmatmul.mubr.f32.gmra.mxu0 %v119
    %v323 = vpop.f32.mrf.mxu0
    %v324 = vadd.f32 %v182, %v323
    %v325 = vpop.f32.mrf.mxu0
    %326 = vdwg.mxu0
    %v327 = vld [vmem:[#allocation11] sm:$0xff]
    %v328 = vld [vmem:[#allocation11 + $0x8] sm:$0xff]
    %v329 = vld [vmem:[#allocation11 + $0x10] sm:$0xff]
    %v330 = vld [vmem:[#allocation11 + $0x18] sm:$0xff]
    %v331 = vld [vmem:[#allocation11 + $0x20] sm:$0xff]
    %v332 = vld [vmem:[#allocation11 + $0x28] sm:$0xff]
    %v333 = vld [vmem:[#allocation11 + $0x30] sm:$0xff]
    %v334 = vld [vmem:[#allocation11 + $0x38] sm:$0xff]
    %v335 = vld [vmem:[#allocation11 + $0x40] sm:$0xff]
    %v336 = vld [vmem:[#allocation11 + $0x48] sm:$0xff]
    %v337 = vld [vmem:[#allocation11 + $0x50] sm:$0xff]
    %v338 = vld [vmem:[#allocation11 + $0x58] sm:$0xff]
    %v339 = vld [vmem:[#allocation11 + $0x60] sm:$0xff]
    %v340 = vld [vmem:[#allocation11 + $0x68] sm:$0xff]
    %v341 = vld [vmem:[#allocation11 + $0x70] sm:$0xff]
    %v342 = vld [vmem:[#allocation11 + $0x78] sm:$0xff]
    %v343 = vld [vmem:[#allocation11 + $0x80] sm:$0xff]
    %v344 = vld [vmem:[#allocation11 + $0x88] sm:$0xff]
    %v345 = vld [vmem:[#allocation11 + $0x90] sm:$0xff]
    %v346 = vld [vmem:[#allocation11 + $0x98] sm:$0xff]
    %v347 = vld [vmem:[#allocation11 + $0xa0] sm:$0xff]
    %v348 = vld [vmem:[#allocation11 + $0xa8] sm:$0xff]
    %v349 = vld [vmem:[#allocation11 + $0xb0] sm:$0xff]
    %v350 = vld [vmem:[#allocation11 + $0xb8] sm:$0xff]
    %v351 = vld [vmem:[#allocation11 + $0xc0] sm:$0xff]
    %v352 = vld [vmem:[#allocation11 + $0xc8] sm:$0xff]
    %v353 = vld [vmem:[#allocation11 + $0xd0] sm:$0xff]
    %v354 = vld [vmem:[#allocation11 + $0xd8] sm:$0xff]
    %v355 = vld [vmem:[#allocation11 + $0xe0] sm:$0xff]
    %v356 = vld [vmem:[#allocation11 + $0xe8] sm:$0xff]
    %v357 = vld [vmem:[#allocation11 + $0xf0] sm:$0xff]
    %v358 = vld [vmem:[#allocation11 + $0xf8] sm:$0xff]
    %v359 = vld [vmem:[#allocation11 + $0x100] sm:$0xff]
    %v360 = vld [vmem:[#allocation11 + $0x108] sm:$0xff]
    %v361 = vld [vmem:[#allocation11 + $0x110] sm:$0xff]
    %v362 = vld [vmem:[#allocation11 + $0x118] sm:$0xff]
    %v363 = vld [vmem:[#allocation11 + $0x120] sm:$0xff]
    %v364 = vld [vmem:[#allocation11 + $0x128] sm:$0xff]
    %v365 = vld [vmem:[#allocation11 + $0x130] sm:$0xff]
    %v366 = vld [vmem:[#allocation11 + $0x138] sm:$0xff]
    %v367 = vld [vmem:[#allocation11 + $0x140] sm:$0xff]
    %v368 = vld [vmem:[#allocation11 + $0x148] sm:$0xff]
    %v369 = vld [vmem:[#allocation11 + $0x150] sm:$0xff]
    %v370 = vld [vmem:[#allocation11 + $0x158] sm:$0xff]
    %v371 = vld [vmem:[#allocation11 + $0x160] sm:$0xff]
    %v372 = vld [vmem:[#allocation11 + $0x168] sm:$0xff]
    %v373 = vld [vmem:[#allocation11 + $0x170] sm:$0xff]
    %v374 = vld [vmem:[#allocation11 + $0x178] sm:$0xff]
    %v375 = vld [vmem:[%s7] sm:$0x7]
    %v377 = vlaneseq
    %v378 = vshrl.u32 %v377, 7
    %v379 = vsub.s32 0, %v378
    %v380 = vrot.slane %v375, %v379
    %v381 = vlaneseq
    %v382 = vshrl.u32 %v381, 7
    %v383 = vsub.s32 1, %v382
    %v384 = vrot.slane %v375, %v383
    %v385 = vlaneseq
    %v386 = vshrl.u32 %v385, 7
    %v387 = vsub.s32 2, %v386
    %v388 = vrot.slane %v375, %v387
    %392 = vmatprep.subr.mxu0 %v373
    %393 = vmatpush1.msra.mxu0 %v372
    %394 = vmatprep.subr.mxu0 %v370
    %395 = vmatpush1.msra.mxu0 %v369
    %396 = vmatprep.subr.mxu0 %v367
    %397 = vmatpush1.msra.mxu0 %v366
    %398 = vmatprep.subr.mxu0 %v364
    %399 = vmatpush1.msra.mxu0 %v363
    %400 = vmatprep.subr.mxu0 %v361
    %401 = vmatpush1.msra.mxu0 %v360
    %402 = vmatprep.subr.mxu0 %v358
    %403 = vmatpush1.msra.mxu0 %v357
    %404 = vmatprep.subr.mxu0 %v355
    %405 = vmatpush1.msra.mxu0 %v354
    %406 = vmatprep.subr.mxu0 %v352
    %407 = vmatpush1.msra.mxu0 %v351
    %408 = vmatprep.subr.mxu0 %v349
    %409 = vmatpush1.msra.mxu0 %v348
    %410 = vmatprep.subr.mxu0 %v346
    %411 = vmatpush1.msra.mxu0 %v345
    %412 = vmatprep.subr.mxu0 %v343
    %413 = vmatpush1.msra.mxu0 %v342
    %414 = vmatprep.subr.mxu0 %v340
    %415 = vmatpush1.msra.mxu0 %v339
    %416 = vmatprep.subr.mxu0 %v337
    %417 = vmatpush1.msra.mxu0 %v336
    %418 = vmatprep.subr.mxu0 %v334
    %419 = vmatpush1.msra.mxu0 %v333
    %420 = vmatprep.subr.mxu0 %v331
    %421 = vmatpush1.msra.mxu0 %v330
    %422 = vmatprep.subr.mxu0 %v328
    %423 = vmatpush1.msra.mxu0 %v327
    %424 = vmatprep.subr.mxu0 0.0
    %425 = vmatpush2.msra.mxu0 0.0
    %426 = vmatprep.subr.mxu0 0.0
    %427 = vmatpush2.msra.mxu0 0.0
    %428 = vmatprep.subr.mxu0 0.0
    %429 = vmatpush2.msra.mxu0 0.0
    %430 = vmatprep.subr.mxu0 0.0
    %431 = vmatpush2.msra.mxu0 0.0
    %432 = vmatprep.subr.mxu0 0.0
    %433 = vmatpush2.msra.mxu0 0.0
    %434 = vmatprep.subr.mxu0 0.0
    %435 = vmatpush2.msra.mxu0 0.0
    %436 = vmatprep.subr.mxu0 0.0
    %437 = vmatpush2.msra.mxu0 0.0
    %438 = vmatprep.subr.mxu0 0.0
    %439 = vmatpush2.msra.mxu0 0.0
    %440 = vmatprep.subr.mxu0 0.0
    %441 = vmatpush2.msra.mxu0 0.0
    %442 = vmatprep.subr.mxu0 0.0
    %443 = vmatpush2.msra.mxu0 0.0
    %444 = vmatprep.subr.mxu0 0.0
    %445 = vmatpush2.msra.mxu0 0.0
    %446 = vmatprep.subr.mxu0 0.0
    %447 = vmatpush2.msra.mxu0 0.0
    %448 = vmatprep.subr.mxu0 0.0
    %449 = vmatpush2.msra.mxu0 0.0
    %450 = vmatprep.subr.mxu0 0.0
    %451 = vmatpush2.msra.mxu0 0.0
    %452 = vmatprep.subr.mxu0 0.0
    %453 = vmatpush2.msra.mxu0 0.0
    %454 = vmatprep.subr.mxu0 0.0
    %455 = vmatpush2.msra.mxu0 0.0
    %456 = vmatprep.mubr.f32.mxu0 0.0
    %457 = vmatmul.mubr.f32.gmra.mxu0 %v120
    %v458 = vpop.f32.mrf.mxu0
    %v459 = vadd.f32 %v380, %v458
    %v460 = vpop.f32.mrf.mxu0
    %v461 = vadd.f32 %v384, %v460
    %462 = vdwg.mxu0
    %463 = vmatprep.subr.mxu0 0.0
    %464 = vmatpush1.msra.mxu0 %v374
    %465 = vmatprep.subr.mxu0 0.0
    %466 = vmatpush1.msra.mxu0 %v371
    %467 = vmatprep.subr.mxu0 0.0
    %468 = vmatpush1.msra.mxu0 %v368
    %469 = vmatprep.subr.mxu0 0.0
    %470 = vmatpush1.msra.mxu0 %v365
    %471 = vmatprep.subr.mxu0 0.0
    %472 = vmatpush1.msra.mxu0 %v362
    %473 = vmatprep.subr.mxu0 0.0
    %474 = vmatpush1.msra.mxu0 %v359
    %475 = vmatprep.subr.mxu0 0.0
    %476 = vmatpush1.msra.mxu0 %v356
    %477 = vmatprep.subr.mxu0 0.0
    %478 = vmatpush1.msra.mxu0 %v353
    %479 = vmatprep.subr.mxu0 0.0
    %480 = vmatpush1.msra.mxu0 %v350
    %481 = vmatprep.subr.mxu0 0.0
    %482 = vmatpush1.msra.mxu0 %v347
    %483 = vmatprep.subr.mxu0 0.0
    %484 = vmatpush1.msra.mxu0 %v344
    %485 = vmatprep.subr.mxu0 0.0
    %486 = vmatpush1.msra.mxu0 %v341
    %487 = vmatprep.subr.mxu0 0.0
    %488 = vmatpush1.msra.mxu0 %v338
    %489 = vmatprep.subr.mxu0 0.0
    %490 = vmatpush1.msra.mxu0 %v335
    %491 = vmatprep.subr.mxu0 0.0
    %492 = vmatpush1.msra.mxu0 %v332
    %493 = vmatprep.subr.mxu0 0.0
    %494 = vmatpush1.msra.mxu0 %v329
    %495 = vmatprep.subr.mxu0 0.0
    %496 = vmatpush2.msra.mxu0 0.0
    %497 = vmatprep.subr.mxu0 0.0
    %498 = vmatpush2.msra.mxu0 0.0
    %499 = vmatprep.subr.mxu0 0.0
    %500 = vmatpush2.msra.mxu0 0.0
    %501 = vmatprep.subr.mxu0 0.0
    %502 = vmatpush2.msra.mxu0 0.0
    %503 = vmatprep.subr.mxu0 0.0
    %504 = vmatpush2.msra.mxu0 0.0
    %505 = vmatprep.subr.mxu0 0.0
    %506 = vmatpush2.msra.mxu0 0.0
    %507 = vmatprep.subr.mxu0 0.0
    %508 = vmatpush2.msra.mxu0 0.0
    %509 = vmatprep.subr.mxu0 0.0
    %510 = vmatpush2.msra.mxu0 0.0
    %511 = vmatprep.subr.mxu0 0.0
    %512 = vmatpush2.msra.mxu0 0.0
    %513 = vmatprep.subr.mxu0 0.0
    %514 = vmatpush2.msra.mxu0 0.0
    %515 = vmatprep.subr.mxu0 0.0
    %516 = vmatpush2.msra.mxu0 0.0
    %517 = vmatprep.subr.mxu0 0.0
    %518 = vmatpush2.msra.mxu0 0.0
    %519 = vmatprep.subr.mxu0 0.0
    %520 = vmatpush2.msra.mxu0 0.0
    %521 = vmatprep.subr.mxu0 0.0
    %522 = vmatpush2.msra.mxu0 0.0
    %523 = vmatprep.subr.mxu0 0.0
    %524 = vmatpush2.msra.mxu0 0.0
    %525 = vmatprep.subr.mxu0 0.0
    %526 = vmatpush2.msra.mxu0 0.0
    %527 = vmatprep.mubr.f32.mxu0 0.0
    %528 = vmatmul.mubr.f32.gmra.mxu0 %v120
    %v529 = vpop.f32.mrf.mxu0
    %v530 = vadd.f32 %v388, %v529
    %v531 = vpop.f32.mrf.mxu0
    %532 = vdwg.mxu0
    %v533 = vadd.f32 %v253, %v459
    %v534 = vxor.u32 %v533, 2147483648
    %v535 = vmul.f32 %v534, 1.442695
    %v536 = vpow.pop %v535
    %v537 = vadd.f32 %v536, 1.0
    %v538 = vrcp.pop %v537
    %v539 = vmul.f32 1.0, %v538
    %v540 = vadd.f32 %v255, %v461
    %v541 = vxor.u32 %v540, 2147483648
    %v542 = vmul.f32 %v541, 1.442695
    %v543 = vpow.pop %v542
    %v544 = vadd.f32 %v543, 1.0
    %v545 = vrcp.pop %v544
    %v546 = vmul.f32 1.0, %v545
    %v547 = vmul.f32 %v539, %v530
    %v548 = vadd.f32 %v324, %v547
    %v549 = vtanh.pop %v548
    %v550 = vsub.f32 1.0, %v546
    %v551 = vmul.f32 %v550, %v549
    %v552 = vmul.f32 %v546, %v120
    %v553 = vadd.f32 %v551, %v552
    %v554 = vld [vmem:[#allocation8] sm:$0xff]
    %v555 = vld [vmem:[#allocation8 + $0x8] sm:$0xff]
    %v556 = vld [vmem:[#allocation8 + $0x10] sm:$0xff]
    %v557 = vld [vmem:[#allocation8 + $0x18] sm:$0xff]
    %v558 = vld [vmem:[#allocation8 + $0x20] sm:$0xff]
    %v559 = vld [vmem:[#allocation8 + $0x28] sm:$0xff]
    %v560 = vld [vmem:[#allocation8 + $0x30] sm:$0xff]
    %v561 = vld [vmem:[#allocation8 + $0x38] sm:$0xff]
    %v562 = vld [vmem:[#allocation8 + $0x40] sm:$0xff]
    %v563 = vld [vmem:[#allocation8 + $0x48] sm:$0xff]
    %v564 = vld [vmem:[#allocation8 + $0x50] sm:$0xff]
    %v565 = vld [vmem:[#allocation8 + $0x58] sm:$0xff]
    %v566 = vld [vmem:[#allocation8 + $0x60] sm:$0xff]
    %v567 = vld [vmem:[#allocation8 + $0x68] sm:$0xff]
    %v568 = vld [vmem:[#allocation8 + $0x70] sm:$0xff]
    %v569 = vld [vmem:[#allocation8 + $0x78] sm:$0xff]
    %v570 = vld [vmem:[#allocation8 + $0x80] sm:$0xff]
    %v571 = vld [vmem:[#allocation8 + $0x88] sm:$0xff]
    %v572 = vld [vmem:[#allocation8 + $0x90] sm:$0xff]
    %v573 = vld [vmem:[#allocation8 + $0x98] sm:$0xff]
    %v574 = vld [vmem:[#allocation8 + $0xa0] sm:$0xff]
    %v575 = vld [vmem:[#allocation8 + $0xa8] sm:$0xff]
    %v576 = vld [vmem:[#allocation8 + $0xb0] sm:$0xff]
    %v577 = vld [vmem:[#allocation8 + $0xb8] sm:$0xff]
    %v578 = vld [vmem:[#allocation8 + $0xc0] sm:$0xff]
    %v579 = vld [vmem:[#allocation8 + $0xc8] sm:$0xff]
    %v580 = vld [vmem:[#allocation8 + $0xd0] sm:$0xff]
    %v581 = vld [vmem:[#allocation8 + $0xd8] sm:$0xff]
    %v582 = vld [vmem:[#allocation8 + $0xe0] sm:$0xff]
    %v583 = vld [vmem:[#allocation8 + $0xe8] sm:$0xff]
    %v584 = vld [vmem:[#allocation8 + $0xf0] sm:$0xff]
    %v585 = vld [vmem:[#allocation8 + $0xf8] sm:$0xff]
    %v586 = vld [vmem:[#allocation8 + $0x100] sm:$0xff]
    %v587 = vld [vmem:[#allocation8 + $0x108] sm:$0xff]
    %v588 = vld [vmem:[#allocation8 + $0x110] sm:$0xff]
    %v589 = vld [vmem:[#allocation8 + $0x118] sm:$0xff]
    %v590 = vld [vmem:[#allocation8 + $0x120] sm:$0xff]
    %v591 = vld [vmem:[#allocation8 + $0x128] sm:$0xff]
    %v592 = vld [vmem:[#allocation8 + $0x130] sm:$0xff]
    %v593 = vld [vmem:[#allocation8 + $0x138] sm:$0xff]
    %v594 = vld [vmem:[#allocation8 + $0x140] sm:$0xff]
    %v595 = vld [vmem:[#allocation8 + $0x148] sm:$0xff]
    %v596 = vld [vmem:[#allocation8 + $0x150] sm:$0xff]
    %v597 = vld [vmem:[#allocation8 + $0x158] sm:$0xff]
    %v598 = vld [vmem:[#allocation8 + $0x160] sm:$0xff]
    %v599 = vld [vmem:[#allocation8 + $0x168] sm:$0xff]
    %v600 = vld [vmem:[#allocation8 + $0x170] sm:$0xff]
    %v601 = vld [vmem:[#allocation8 + $0x178] sm:$0xff]
    %v602 = vld [vmem:[#allocation8 + $0x180] sm:$0xff]
    %v603 = vld [vmem:[#allocation8 + $0x188] sm:$0xff]
    %v604 = vld [vmem:[#allocation8 + $0x190] sm:$0xff]
    %v605 = vld [vmem:[#allocation8 + $0x198] sm:$0xff]
    %v606 = vld [vmem:[#allocation8 + $0x1a0] sm:$0xff]
    %v607 = vld [vmem:[#allocation8 + $0x1a8] sm:$0xff]
    %v608 = vld [vmem:[#allocation8 + $0x1b0] sm:$0xff]
    %v609 = vld [vmem:[#allocation8 + $0x1b8] sm:$0xff]
    %v610 = vld [vmem:[#allocation8 + $0x1c0] sm:$0xff]
    %v611 = vld [vmem:[#allocation8 + $0x1c8] sm:$0xff]
    %v612 = vld [vmem:[#allocation8 + $0x1d0] sm:$0xff]
    %v613 = vld [vmem:[#allocation8 + $0x1d8] sm:$0xff]
    %v614 = vld [vmem:[#allocation8 + $0x1e0] sm:$0xff]
    %v615 = vld [vmem:[#allocation8 + $0x1e8] sm:$0xff]
    %v616 = vld [vmem:[#allocation8 + $0x1f0] sm:$0xff]
    %v617 = vld [vmem:[#allocation8 + $0x1f8] sm:$0xff]
    %v618 = vld [vmem:[#allocation8 + $0x200] sm:$0xff]
    %v619 = vld [vmem:[#allocation8 + $0x208] sm:$0xff]
    %v620 = vld [vmem:[#allocation8 + $0x210] sm:$0xff]
    %v621 = vld [vmem:[#allocation8 + $0x218] sm:$0xff]
    %v622 = vld [vmem:[#allocation8 + $0x220] sm:$0xff]
    %v623 = vld [vmem:[#allocation8 + $0x228] sm:$0xff]
    %v624 = vld [vmem:[#allocation8 + $0x230] sm:$0xff]
    %v625 = vld [vmem:[#allocation8 + $0x238] sm:$0xff]
    %v626 = vld [vmem:[#allocation8 + $0x240] sm:$0xff]
    %v627 = vld [vmem:[#allocation8 + $0x248] sm:$0xff]
    %v628 = vld [vmem:[#allocation8 + $0x250] sm:$0xff]
    %v629 = vld [vmem:[#allocation8 + $0x258] sm:$0xff]
    %v630 = vld [vmem:[#allocation8 + $0x260] sm:$0xff]
    %v631 = vld [vmem:[#allocation8 + $0x268] sm:$0xff]
    %v632 = vld [vmem:[#allocation8 + $0x270] sm:$0xff]
    %v633 = vld [vmem:[#allocation8 + $0x278] sm:$0xff]
    %v634 = vld [vmem:[#allocation8 + $0x280] sm:$0xff]
    %v635 = vld [vmem:[#allocation8 + $0x288] sm:$0xff]
    %v636 = vld [vmem:[#allocation8 + $0x290] sm:$0xff]
    %v637 = vld [vmem:[#allocation8 + $0x298] sm:$0xff]
    %v638 = vld [vmem:[#allocation8 + $0x2a0] sm:$0xff]
    %v639 = vld [vmem:[#allocation8 + $0x2a8] sm:$0xff]
    %v640 = vld [vmem:[#allocation8 + $0x2b0] sm:$0xff]
    %v641 = vld [vmem:[#allocation8 + $0x2b8] sm:$0xff]
    %v642 = vld [vmem:[#allocation8 + $0x2c0] sm:$0xff]
    %v643 = vld [vmem:[#allocation8 + $0x2c8] sm:$0xff]
    %v644 = vld [vmem:[#allocation8 + $0x2d0] sm:$0xff]
    %v645 = vld [vmem:[#allocation8 + $0x2d8] sm:$0xff]
    %v646 = vld [vmem:[#allocation8 + $0x2e0] sm:$0xff]
    %v647 = vld [vmem:[#allocation8 + $0x2e8] sm:$0xff]
    %v648 = vld [vmem:[#allocation8 + $0x2f0] sm:$0xff]
    %v649 = vld [vmem:[#allocation8 + $0x2f8] sm:$0xff]
    %v650 = vld [vmem:[#allocation8 + $0x300] sm:$0xff]
    %v651 = vld [vmem:[#allocation8 + $0x308] sm:$0xff]
    %v652 = vld [vmem:[#allocation8 + $0x310] sm:$0xff]
    %v653 = vld [vmem:[#allocation8 + $0x318] sm:$0xff]
    %v654 = vld [vmem:[#allocation8 + $0x320] sm:$0xff]
    %v655 = vld [vmem:[#allocation8 + $0x328] sm:$0xff]
    %v656 = vld [vmem:[#allocation8 + $0x330] sm:$0xff]
    %v657 = vld [vmem:[#allocation8 + $0x338] sm:$0xff]
    %v658 = vld [vmem:[#allocation8 + $0x340] sm:$0xff]
    %v659 = vld [vmem:[#allocation8 + $0x348] sm:$0xff]
    %v660 = vld [vmem:[#allocation8 + $0x350] sm:$0xff]
    %v661 = vld [vmem:[#allocation8 + $0x358] sm:$0xff]
    %v662 = vld [vmem:[#allocation8 + $0x360] sm:$0xff]
    %v663 = vld [vmem:[#allocation8 + $0x368] sm:$0xff]
    %v664 = vld [vmem:[#allocation8 + $0x370] sm:$0xff]
    %v665 = vld [vmem:[#allocation8 + $0x378] sm:$0xff]
    %v666 = vld [vmem:[#allocation8 + $0x380] sm:$0xff]
    %v667 = vld [vmem:[#allocation8 + $0x388] sm:$0xff]
    %v668 = vld [vmem:[#allocation8 + $0x390] sm:$0xff]
    %v669 = vld [vmem:[#allocation8 + $0x398] sm:$0xff]
    %v670 = vld [vmem:[#allocation8 + $0x3a0] sm:$0xff]
    %v671 = vld [vmem:[#allocation8 + $0x3a8] sm:$0xff]
    %v672 = vld [vmem:[#allocation8 + $0x3b0] sm:$0xff]
    %v673 = vld [vmem:[#allocation8 + $0x3b8] sm:$0xff]
    %v674 = vld [vmem:[#allocation8 + $0x3c0] sm:$0xff]
    %v675 = vld [vmem:[#allocation8 + $0x3c8] sm:$0xff]
    %v676 = vld [vmem:[#allocation8 + $0x3d0] sm:$0xff]
    %v677 = vld [vmem:[#allocation8 + $0x3d8] sm:$0xff]
    %v678 = vld [vmem:[#allocation8 + $0x3e0] sm:$0xff]
    %v679 = vld [vmem:[#allocation8 + $0x3e8] sm:$0xff]
    %v680 = vld [vmem:[#allocation8 + $0x3f0] sm:$0xff]
    %v681 = vld [vmem:[#allocation8 + $0x3f8] sm:$0xff]
    %v683 = vcombine.high %v553, %v553
    %v685 = vunpack.c.l.s4 1966171168
    %v686 = vunpack.c.0.s8 %v685
    %v687 = vlaneseq
    %v688 = vshrl.u32 %v687, 7
    %v689 = vsub.s32 %v686, %v688
    %v690 = vrot.slane %v553, %v689
    %v692 = vunpack.c.l.s4 1966171168
    %v693 = vunpack.c.0.s8 %v692
    %v694 = vlaneseq
    %v695 = vshrl.u32 %v694, 7
    %v696 = vsub.s32 %v693, %v695
    %v697 = vrot.slane %v683, %v696
    %v698 = vcombine.high %v690, %v690
    %v699 = vcombine.high %v697, %v697
    %v701 = vunpack.c.l.s4 1966171168
    %v702 = vunpack.c.0.s8 %v701
    %v703 = vlaneseq
    %v704 = vshrl.u32 %v703, 7
    %v705 = vsub.s32 %v702, %v704
    %v706 = vrot.slane %v690, %v705
    %v708 = vunpack.c.l.s4 1966171168
    %v709 = vunpack.c.0.s8 %v708
    %v710 = vlaneseq
    %v711 = vshrl.u32 %v710, 7
    %v712 = vsub.s32 %v709, %v711
    %v713 = vrot.slane %v697, %v712
    %v715 = vunpack.c.l.s4 1966171168
    %v716 = vunpack.c.0.s8 %v715
    %v717 = vlaneseq
    %v718 = vshrl.u32 %v717, 7
    %v719 = vsub.s32 %v716, %v718
    %v720 = vrot.slane %v698, %v719
    %v722 = vunpack.c.l.s4 1966171168
    %v723 = vunpack.c.0.s8 %v722
    %v724 = vlaneseq
    %v725 = vshrl.u32 %v724, 7
    %v726 = vsub.s32 %v723, %v725
    %v727 = vrot.slane %v699, %v726
    %v728 = vcombine.high %v706, %v706
    %v729 = vcombine.high %v713, %v713
    %v730 = vcombine.high %v720, %v720
    %v731 = vcombine.high %v727, %v727
    %v732 = vlaneseq
    %v733 = vshrl.u32 %v732, 7
    %v734 = vsub.s32 0, %v733
    %v735 = vrot.slane %v706, %v734
    %v736 = vlaneseq
    %v737 = vshrl.u32 %v736, 7
    %v738 = vsub.s32 0, %v737
    %v739 = vrot.slane %v720, %v738
    %v740 = vlaneseq
    %v741 = vshrl.u32 %v740, 7
    %v742 = vsub.s32 0, %v741
    %v743 = vrot.slane %v728, %v742
    %v744 = vlaneseq
    %v745 = vshrl.u32 %v744, 7
    %v746 = vsub.s32 0, %v745
    %v747 = vrot.slane %v730, %v746
    %v748 = vlaneseq
    %v749 = vshrl.u32 %v748, 7
    %v750 = vsub.s32 0, %v749
    %v751 = vrot.slane %v713, %v750
    %v752 = vlaneseq
    %v753 = vshrl.u32 %v752, 7
    %v754 = vsub.s32 0, %v753
    %v755 = vrot.slane %v727, %v754
    %v756 = vlaneseq
    %v757 = vshrl.u32 %v756, 7
    %v758 = vsub.s32 0, %v757
    %v759 = vrot.slane %v729, %v758
    %v760 = vlaneseq
    %v761 = vshrl.u32 %v760, 7
    %v762 = vsub.s32 0, %v761
    %v763 = vrot.slane %v731, %v762
    %v772 = vmul.f32 %v735, %v554
    %v773 = vmul.f32 %v735, %v555
    %v774 = vmul.f32 %v735, %v556
    %v775 = vmul.f32 %v735, %v557
    %v776 = vmul.f32 %v735, %v558
    %v777 = vmul.f32 %v735, %v559
    %v778 = vmul.f32 %v735, %v560
    %v779 = vmul.f32 %v735, %v561
    %v780 = vmul.f32 %v735, %v562
    %v781 = vmul.f32 %v735, %v563
    %v782 = vmul.f32 %v735, %v564
    %v783 = vmul.f32 %v735, %v565
    %v784 = vmul.f32 %v735, %v566
    %v785 = vmul.f32 %v735, %v567
    %v786 = vmul.f32 %v735, %v568
    %v787 = vmul.f32 %v735, %v569
    %v788 = vmul.f32 %v739, %v570
    %v789 = vmul.f32 %v739, %v571
    %v790 = vmul.f32 %v739, %v572
    %v791 = vmul.f32 %v739, %v573
    %v792 = vmul.f32 %v739, %v574
    %v793 = vmul.f32 %v739, %v575
    %v794 = vmul.f32 %v739, %v576
    %v795 = vmul.f32 %v739, %v577
    %v796 = vmul.f32 %v739, %v578
    %v797 = vmul.f32 %v739, %v579
    %v798 = vmul.f32 %v739, %v580
    %v799 = vmul.f32 %v739, %v581
    %v800 = vmul.f32 %v739, %v582
    %v801 = vmul.f32 %v739, %v583
    %v802 = vmul.f32 %v739, %v584
    %v803 = vmul.f32 %v739, %v585
    %v804 = vmul.f32 %v743, %v586
    %v805 = vmul.f32 %v743, %v587
    %v806 = vmul.f32 %v743, %v588
    %v807 = vmul.f32 %v743, %v589
    %v808 = vmul.f32 %v743, %v590
    %v809 = vmul.f32 %v743, %v591
    %v810 = vmul.f32 %v743, %v592
    %v811 = vmul.f32 %v743, %v593
    %v812 = vmul.f32 %v743, %v594
    %v813 = vmul.f32 %v743, %v595
    %v814 = vmul.f32 %v743, %v596
    %v815 = vmul.f32 %v743, %v597
    %v816 = vmul.f32 %v743, %v598
    %v817 = vmul.f32 %v743, %v599
    %v818 = vmul.f32 %v743, %v600
    %v819 = vmul.f32 %v743, %v601
    %v820 = vmul.f32 %v747, %v602
    %v821 = vmul.f32 %v747, %v603
    %v822 = vmul.f32 %v747, %v604
    %v823 = vmul.f32 %v747, %v605
    %v824 = vmul.f32 %v747, %v606
    %v825 = vmul.f32 %v747, %v607
    %v826 = vmul.f32 %v747, %v608
    %v827 = vmul.f32 %v747, %v609
    %v828 = vmul.f32 %v747, %v610
    %v829 = vmul.f32 %v747, %v611
    %v830 = vmul.f32 %v747, %v612
    %v831 = vmul.f32 %v747, %v613
    %v832 = vmul.f32 %v747, %v614
    %v833 = vmul.f32 %v747, %v615
    %v834 = vmul.f32 %v747, %v616
    %v835 = vmul.f32 %v747, %v617
    %v836 = vmul.f32 %v751, %v618
    %v837 = vmul.f32 %v751, %v619
    %v838 = vmul.f32 %v751, %v620
    %v839 = vmul.f32 %v751, %v621
    %v840 = vmul.f32 %v751, %v622
    %v841 = vmul.f32 %v751, %v623
    %v842 = vmul.f32 %v751, %v624
    %v843 = vmul.f32 %v751, %v625
    %v844 = vmul.f32 %v751, %v626
    %v845 = vmul.f32 %v751, %v627
    %v846 = vmul.f32 %v751, %v628
    %v847 = vmul.f32 %v751, %v629
    %v848 = vmul.f32 %v751, %v630
    %v849 = vmul.f32 %v751, %v631
    %v850 = vmul.f32 %v751, %v632
    %v851 = vmul.f32 %v751, %v633
    %v852 = vmul.f32 %v755, %v634
    %v853 = vmul.f32 %v755, %v635
    %v854 = vmul.f32 %v755, %v636
    %v855 = vmul.f32 %v755, %v637
    %v856 = vmul.f32 %v755, %v638
    %v857 = vmul.f32 %v755, %v639
    %v858 = vmul.f32 %v755, %v640
    %v859 = vmul.f32 %v755, %v641
    %v860 = vmul.f32 %v755, %v642
    %v861 = vmul.f32 %v755, %v643
    %v862 = vmul.f32 %v755, %v644
    %v863 = vmul.f32 %v755, %v645
    %v864 = vmul.f32 %v755, %v646
    %v865 = vmul.f32 %v755, %v647
    %v866 = vmul.f32 %v755, %v648
    %v867 = vmul.f32 %v755, %v649
    %v868 = vmul.f32 %v759, %v650
    %v869 = vmul.f32 %v759, %v651
    %v870 = vmul.f32 %v759, %v652
    %v871 = vmul.f32 %v759, %v653
    %v872 = vmul.f32 %v759, %v654
    %v873 = vmul.f32 %v759, %v655
    %v874 = vmul.f32 %v759, %v656
    %v875 = vmul.f32 %v759, %v657
    %v876 = vmul.f32 %v759, %v658
    %v877 = vmul.f32 %v759, %v659
    %v878 = vmul.f32 %v759, %v660
    %v879 = vmul.f32 %v759, %v661
    %v880 = vmul.f32 %v759, %v662
    %v881 = vmul.f32 %v759, %v663
    %v882 = vmul.f32 %v759, %v664
    %v883 = vmul.f32 %v759, %v665
    %v884 = vmul.f32 %v763, %v666
    %v885 = vmul.f32 %v763, %v667
    %v886 = vmul.f32 %v763, %v668
    %v887 = vmul.f32 %v763, %v669
    %v888 = vmul.f32 %v763, %v670
    %v889 = vmul.f32 %v763, %v671
    %v890 = vmul.f32 %v763, %v672
    %v891 = vmul.f32 %v763, %v673
    %v892 = vmul.f32 %v763, %v674
    %v893 = vmul.f32 %v763, %v675
    %v894 = vmul.f32 %v763, %v676
    %v895 = vmul.f32 %v763, %v677
    %v896 = vmul.f32 %v763, %v678
    %v897 = vmul.f32 %v763, %v679
    %v898 = vmul.f32 %v763, %v680
    %v899 = vmul.f32 %v763, %v681
    %900 = vadd.xlane.f32.xlu0 %v772
    %v901 = vpop.xlane.xlu0 %900
    %902 = vadd.xlane.f32.xlu0 %v773
    %v903 = vpop.xlane.xlu0 %902
    %904 = vadd.xlane.f32.xlu0 %v774
    %v905 = vpop.xlane.xlu0 %904
    %906 = vadd.xlane.f32.xlu0 %v775
    %v907 = vpop.xlane.xlu0 %906
    %908 = vadd.xlane.f32.xlu0 %v776
    %v909 = vpop.xlane.xlu0 %908
    %910 = vadd.xlane.f32.xlu0 %v777
    %v911 = vpop.xlane.xlu0 %910
    %912 = vadd.xlane.f32.xlu0 %v778
    %v913 = vpop.xlane.xlu0 %912
    %914 = vadd.xlane.f32.xlu0 %v779
    %v915 = vpop.xlane.xlu0 %914
    %916 = vadd.xlane.f32.xlu0 %v780
    %v917 = vpop.xlane.xlu0 %916
    %918 = vadd.xlane.f32.xlu0 %v781
    %v919 = vpop.xlane.xlu0 %918
    %920 = vadd.xlane.f32.xlu0 %v782
    %v921 = vpop.xlane.xlu0 %920
    %922 = vadd.xlane.f32.xlu0 %v783
    %v923 = vpop.xlane.xlu0 %922
    %924 = vadd.xlane.f32.xlu0 %v784
    %v925 = vpop.xlane.xlu0 %924
    %926 = vadd.xlane.f32.xlu0 %v785
    %v927 = vpop.xlane.xlu0 %926
    %928 = vadd.xlane.f32.xlu0 %v786
    %v929 = vpop.xlane.xlu0 %928
    %930 = vadd.xlane.f32.xlu0 %v787
    %v931 = vpop.xlane.xlu0 %930
    %932 = vadd.xlane.f32.xlu0 %v788
    %v933 = vpop.xlane.xlu0 %932
    %934 = vadd.xlane.f32.xlu0 %v789
    %v935 = vpop.xlane.xlu0 %934
    %936 = vadd.xlane.f32.xlu0 %v790
    %v937 = vpop.xlane.xlu0 %936
    %938 = vadd.xlane.f32.xlu0 %v791
    %v939 = vpop.xlane.xlu0 %938
    %940 = vadd.xlane.f32.xlu0 %v792
    %v941 = vpop.xlane.xlu0 %940
    %942 = vadd.xlane.f32.xlu0 %v793
    %v943 = vpop.xlane.xlu0 %942
    %944 = vadd.xlane.f32.xlu0 %v794
    %v945 = vpop.xlane.xlu0 %944
    %946 = vadd.xlane.f32.xlu0 %v795
    %v947 = vpop.xlane.xlu0 %946
    %948 = vadd.xlane.f32.xlu0 %v796
    %v949 = vpop.xlane.xlu0 %948
    %950 = vadd.xlane.f32.xlu0 %v797
    %v951 = vpop.xlane.xlu0 %950
    %952 = vadd.xlane.f32.xlu0 %v798
    %v953 = vpop.xlane.xlu0 %952
    %954 = vadd.xlane.f32.xlu0 %v799
    %v955 = vpop.xlane.xlu0 %954
    %956 = vadd.xlane.f32.xlu0 %v800
    %v957 = vpop.xlane.xlu0 %956
    %958 = vadd.xlane.f32.xlu0 %v801
    %v959 = vpop.xlane.xlu0 %958
    %960 = vadd.xlane.f32.xlu0 %v802
    %v961 = vpop.xlane.xlu0 %960
    %962 = vadd.xlane.f32.xlu0 %v803
    %v963 = vpop.xlane.xlu0 %962
    %964 = vadd.xlane.f32.xlu0 %v804
    %v965 = vpop.xlane.xlu0 %964
    %966 = vadd.xlane.f32.xlu0 %v805
    %v967 = vpop.xlane.xlu0 %966
    %968 = vadd.xlane.f32.xlu0 %v806
    %v969 = vpop.xlane.xlu0 %968
    %970 = vadd.xlane.f32.xlu0 %v807
    %v971 = vpop.xlane.xlu0 %970
    %972 = vadd.xlane.f32.xlu0 %v808
    %v973 = vpop.xlane.xlu0 %972
    %974 = vadd.xlane.f32.xlu0 %v809
    %v975 = vpop.xlane.xlu0 %974
    %976 = vadd.xlane.f32.xlu0 %v810
    %v977 = vpop.xlane.xlu0 %976
    %978 = vadd.xlane.f32.xlu0 %v811
    %v979 = vpop.xlane.xlu0 %978
    %980 = vadd.xlane.f32.xlu0 %v812
    %v981 = vpop.xlane.xlu0 %980
    %982 = vadd.xlane.f32.xlu0 %v813
    %v983 = vpop.xlane.xlu0 %982
    %984 = vadd.xlane.f32.xlu0 %v814
    %v985 = vpop.xlane.xlu0 %984
    %986 = vadd.xlane.f32.xlu0 %v815
    %v987 = vpop.xlane.xlu0 %986
    %988 = vadd.xlane.f32.xlu0 %v816
    %v989 = vpop.xlane.xlu0 %988
    %990 = vadd.xlane.f32.xlu0 %v817
    %v991 = vpop.xlane.xlu0 %990
    %992 = vadd.xlane.f32.xlu0 %v818
    %v993 = vpop.xlane.xlu0 %992
    %994 = vadd.xlane.f32.xlu0 %v819
    %v995 = vpop.xlane.xlu0 %994
    %996 = vadd.xlane.f32.xlu0 %v820
    %v997 = vpop.xlane.xlu0 %996
    %998 = vadd.xlane.f32.xlu0 %v821
    %v999 = vpop.xlane.xlu0 %998
    %1000 = vadd.xlane.f32.xlu0 %v822
    %v1001 = vpop.xlane.xlu0 %1000
    %1002 = vadd.xlane.f32.xlu0 %v823
    %v1003 = vpop.xlane.xlu0 %1002
    %1004 = vadd.xlane.f32.xlu0 %v824
    %v1005 = vpop.xlane.xlu0 %1004
    %1006 = vadd.xlane.f32.xlu0 %v825
    %v1007 = vpop.xlane.xlu0 %1006
    %1008 = vadd.xlane.f32.xlu0 %v826
    %v1009 = vpop.xlane.xlu0 %1008
    %1010 = vadd.xlane.f32.xlu0 %v827
    %v1011 = vpop.xlane.xlu0 %1010
    %1012 = vadd.xlane.f32.xlu0 %v828
    %v1013 = vpop.xlane.xlu0 %1012
    %1014 = vadd.xlane.f32.xlu0 %v829
    %v1015 = vpop.xlane.xlu0 %1014
    %1016 = vadd.xlane.f32.xlu0 %v830
    %v1017 = vpop.xlane.xlu0 %1016
    %1018 = vadd.xlane.f32.xlu0 %v831
    %v1019 = vpop.xlane.xlu0 %1018
    %1020 = vadd.xlane.f32.xlu0 %v832
    %v1021 = vpop.xlane.xlu0 %1020
    %1022 = vadd.xlane.f32.xlu0 %v833
    %v1023 = vpop.xlane.xlu0 %1022
    %1024 = vadd.xlane.f32.xlu0 %v834
    %v1025 = vpop.xlane.xlu0 %1024
    %1026 = vadd.xlane.f32.xlu0 %v835
    %v1027 = vpop.xlane.xlu0 %1026
    %1028 = vadd.xlane.f32.xlu0 %v836
    %v1029 = vpop.xlane.xlu0 %1028
    %1030 = vadd.xlane.f32.xlu0 %v837
    %v1031 = vpop.xlane.xlu0 %1030
    %1032 = vadd.xlane.f32.xlu0 %v838
    %v1033 = vpop.xlane.xlu0 %1032
    %1034 = vadd.xlane.f32.xlu0 %v839
    %v1035 = vpop.xlane.xlu0 %1034
    %1036 = vadd.xlane.f32.xlu0 %v840
    %v1037 = vpop.xlane.xlu0 %1036
    %1038 = vadd.xlane.f32.xlu0 %v841
    %v1039 = vpop.xlane.xlu0 %1038
    %1040 = vadd.xlane.f32.xlu0 %v842
    %v1041 = vpop.xlane.xlu0 %1040
    %1042 = vadd.xlane.f32.xlu0 %v843
    %v1043 = vpop.xlane.xlu0 %1042
    %1044 = vadd.xlane.f32.xlu0 %v844
    %v1045 = vpop.xlane.xlu0 %1044
    %1046 = vadd.xlane.f32.xlu0 %v845
    %v1047 = vpop.xlane.xlu0 %1046
    %1048 = vadd.xlane.f32.xlu0 %v846
    %v1049 = vpop.xlane.xlu0 %1048
    %1050 = vadd.xlane.f32.xlu0 %v847
    %v1051 = vpop.xlane.xlu0 %1050
    %1052 = vadd.xlane.f32.xlu0 %v848
    %v1053 = vpop.xlane.xlu0 %1052
    %1054 = vadd.xlane.f32.xlu0 %v849
    %v1055 = vpop.xlane.xlu0 %1054
    %1056 = vadd.xlane.f32.xlu0 %v850
    %v1057 = vpop.xlane.xlu0 %1056
    %1058 = vadd.xlane.f32.xlu0 %v851
    %v1059 = vpop.xlane.xlu0 %1058
    %1060 = vadd.xlane.f32.xlu0 %v852
    %v1061 = vpop.xlane.xlu0 %1060
    %1062 = vadd.xlane.f32.xlu0 %v853
    %v1063 = vpop.xlane.xlu0 %1062
    %1064 = vadd.xlane.f32.xlu0 %v854
    %v1065 = vpop.xlane.xlu0 %1064
    %1066 = vadd.xlane.f32.xlu0 %v855
    %v1067 = vpop.xlane.xlu0 %1066
    %1068 = vadd.xlane.f32.xlu0 %v856
    %v1069 = vpop.xlane.xlu0 %1068
    %1070 = vadd.xlane.f32.xlu0 %v857
    %v1071 = vpop.xlane.xlu0 %1070
    %1072 = vadd.xlane.f32.xlu0 %v858
    %v1073 = vpop.xlane.xlu0 %1072
    %1074 = vadd.xlane.f32.xlu0 %v859
    %v1075 = vpop.xlane.xlu0 %1074
    %1076 = vadd.xlane.f32.xlu0 %v860
    %v1077 = vpop.xlane.xlu0 %1076
    %1078 = vadd.xlane.f32.xlu0 %v861
    %v1079 = vpop.xlane.xlu0 %1078
    %1080 = vadd.xlane.f32.xlu0 %v862
    %v1081 = vpop.xlane.xlu0 %1080
    %1082 = vadd.xlane.f32.xlu0 %v863
    %v1083 = vpop.xlane.xlu0 %1082
    %1084 = vadd.xlane.f32.xlu0 %v864
    %v1085 = vpop.xlane.xlu0 %1084
    %1086 = vadd.xlane.f32.xlu0 %v865
    %v1087 = vpop.xlane.xlu0 %1086
    %1088 = vadd.xlane.f32.xlu0 %v866
    %v1089 = vpop.xlane.xlu0 %1088
    %1090 = vadd.xlane.f32.xlu0 %v867
    %v1091 = vpop.xlane.xlu0 %1090
    %1092 = vadd.xlane.f32.xlu0 %v868
    %v1093 = vpop.xlane.xlu0 %1092
    %1094 = vadd.xlane.f32.xlu0 %v869
    %v1095 = vpop.xlane.xlu0 %1094
    %1096 = vadd.xlane.f32.xlu0 %v870
    %v1097 = vpop.xlane.xlu0 %1096
    %1098 = vadd.xlane.f32.xlu0 %v871
    %v1099 = vpop.xlane.xlu0 %1098
    %1100 = vadd.xlane.f32.xlu0 %v872
    %v1101 = vpop.xlane.xlu0 %1100
    %1102 = vadd.xlane.f32.xlu0 %v873
    %v1103 = vpop.xlane.xlu0 %1102
    %1104 = vadd.xlane.f32.xlu0 %v874
    %v1105 = vpop.xlane.xlu0 %1104
    %1106 = vadd.xlane.f32.xlu0 %v875
    %v1107 = vpop.xlane.xlu0 %1106
    %1108 = vadd.xlane.f32.xlu0 %v876
    %v1109 = vpop.xlane.xlu0 %1108
    %1110 = vadd.xlane.f32.xlu0 %v877
    %v1111 = vpop.xlane.xlu0 %1110
    %1112 = vadd.xlane.f32.xlu0 %v878
    %v1113 = vpop.xlane.xlu0 %1112
    %1114 = vadd.xlane.f32.xlu0 %v879
    %v1115 = vpop.xlane.xlu0 %1114
    %1116 = vadd.xlane.f32.xlu0 %v880
    %v1117 = vpop.xlane.xlu0 %1116
    %1118 = vadd.xlane.f32.xlu0 %v881
    %v1119 = vpop.xlane.xlu0 %1118
    %1120 = vadd.xlane.f32.xlu0 %v882
    %v1121 = vpop.xlane.xlu0 %1120
    %1122 = vadd.xlane.f32.xlu0 %v883
    %v1123 = vpop.xlane.xlu0 %1122
    %1124 = vadd.xlane.f32.xlu0 %v884
    %v1125 = vpop.xlane.xlu0 %1124
    %1126 = vadd.xlane.f32.xlu0 %v885
    %v1127 = vpop.xlane.xlu0 %1126
    %1128 = vadd.xlane.f32.xlu0 %v886
    %v1129 = vpop.xlane.xlu0 %1128
    %1130 = vadd.xlane.f32.xlu0 %v887
    %v1131 = vpop.xlane.xlu0 %1130
    %1132 = vadd.xlane.f32.xlu0 %v888
    %v1133 = vpop.xlane.xlu0 %1132
    %1134 = vadd.xlane.f32.xlu0 %v889
    %v1135 = vpop.xlane.xlu0 %1134
    %1136 = vadd.xlane.f32.xlu0 %v890
    %v1137 = vpop.xlane.xlu0 %1136
    %1138 = vadd.xlane.f32.xlu0 %v891
    %v1139 = vpop.xlane.xlu0 %1138
    %1140 = vadd.xlane.f32.xlu0 %v892
    %v1141 = vpop.xlane.xlu0 %1140
    %1142 = vadd.xlane.f32.xlu0 %v893
    %v1143 = vpop.xlane.xlu0 %1142
    %1144 = vadd.xlane.f32.xlu0 %v894
    %v1145 = vpop.xlane.xlu0 %1144
    %1146 = vadd.xlane.f32.xlu0 %v895
    %v1147 = vpop.xlane.xlu0 %1146
    %1148 = vadd.xlane.f32.xlu0 %v896
    %v1149 = vpop.xlane.xlu0 %1148
    %1150 = vadd.xlane.f32.xlu0 %v897
    %v1151 = vpop.xlane.xlu0 %1150
    %1152 = vadd.xlane.f32.xlu0 %v898
    %v1153 = vpop.xlane.xlu0 %1152
    %1154 = vadd.xlane.f32.xlu0 %v899
    %v1155 = vpop.xlane.xlu0 %1154
    %s1156 = sld [smem:[#allocation2]]
    %v1157 = vlaneseq
    %v1158 = vand.u32 %v1157, 127
    %v1159 = vstv %s1156
    %vm1160 = vcmp.lt.s32.totalorder %v1158, %v1159
    %v1289 = vlaneseq
    %v1290 = vshrl.u32 %v1289, 7
    %v1291 = vsub.s32 %v1158, %v1290
    %v1292 = vrot.slane %v901, %v1291
    %v1293 = vadd.s32 %v1158, 4294967288
    %v1294 = vlaneseq
    %v1295 = vshrl.u32 %v1294, 7
    %v1296 = vsub.s32 %v1293, %v1295
    %v1297 = vrot.slane %v903, %v1296
    %vm1298 = vcmask 130112
    %v1299 = vsel %vm1298, %v1297, %v1292
    %v1300 = vadd.s32 %v1158, 4294967280
    %v1301 = vlaneseq
    %v1302 = vshrl.u32 %v1301, 7
    %v1303 = vsub.s32 %v1300, %v1302
    %v1304 = vrot.slane %v905, %v1303
    %vm1305 = vcmask 195712
    %v1306 = vsel %vm1305, %v1304, %v1299
    %v1307 = vadd.s32 %v1158, 4294967272
    %v1308 = vlaneseq
    %v1309 = vshrl.u32 %v1308, 7
    %v1310 = vsub.s32 %v1307, %v1309
    %v1311 = vrot.slane %v907, %v1310
    %vm1312 = vcmask 261312
    %v1313 = vsel %vm1312, %v1311, %v1306
    %v1314 = vadd.s32 %v1158, 4294967264
    %v1315 = vlaneseq
    %v1316 = vshrl.u32 %v1315, 7
    %v1317 = vsub.s32 %v1314, %v1316
    %v1318 = vrot.slane %v909, %v1317
    %vm1319 = vcmask 326912
    %v1320 = vsel %vm1319, %v1318, %v1313
    %v1321 = vadd.s32 %v1158, 4294967256
    %v1322 = vlaneseq
    %v1323 = vshrl.u32 %v1322, 7
    %v1324 = vsub.s32 %v1321, %v1323
    %v1325 = vrot.slane %v911, %v1324
    %vm1326 = vcmask 392512
    %v1327 = vsel %vm1326, %v1325, %v1320
    %v1328 = vadd.s32 %v1158, 4294967248
    %v1329 = vlaneseq
    %v1330 = vshrl.u32 %v1329, 7
    %v1331 = vsub.s32 %v1328, %v1330
    %v1332 = vrot.slane %v913, %v1331
    %vm1333 = vcmask 458112
    %v1334 = vsel %vm1333, %v1332, %v1327
    %v1335 = vadd.s32 %v1158, 4294967240
    %v1336 = vlaneseq
    %v1337 = vshrl.u32 %v1336, 7
    %v1338 = vsub.s32 %v1335, %v1337
    %v1339 = vrot.slane %v915, %v1338
    %vm1340 = vcmask 523712
    %v1341 = vsel %vm1340, %v1339, %v1334
    %v1342 = vadd.s32 %v1158, 4294967232
    %v1343 = vlaneseq
    %v1344 = vshrl.u32 %v1343, 7
    %v1345 = vsub.s32 %v1342, %v1344
    %v1346 = vrot.slane %v917, %v1345
    %vm1347 = vcmask 589312
    %v1348 = vsel %vm1347, %v1346, %v1341
    %v1349 = vadd.s32 %v1158, 4294967224
    %v1350 = vlaneseq
    %v1351 = vshrl.u32 %v1350, 7
    %v1352 = vsub.s32 %v1349, %v1351
    %v1353 = vrot.slane %v919, %v1352
    %vm1354 = vcmask 654912
    %v1355 = vsel %vm1354, %v1353, %v1348
    %v1356 = vadd.s32 %v1158, 4294967216
    %v1357 = vlaneseq
    %v1358 = vshrl.u32 %v1357, 7
    %v1359 = vsub.s32 %v1356, %v1358
    %v1360 = vrot.slane %v921, %v1359
    %vm1361 = vcmask 720512
    %v1362 = vsel %vm1361, %v1360, %v1355
    %v1363 = vadd.s32 %v1158, 4294967208
    %v1364 = vlaneseq
    %v1365 = vshrl.u32 %v1364, 7
    %v1366 = vsub.s32 %v1363, %v1365
    %v1367 = vrot.slane %v923, %v1366
    %vm1368 = vcmask 786112
    %v1369 = vsel %vm1368, %v1367, %v1362
    %v1370 = vadd.s32 %v1158, 4294967200
    %v1371 = vlaneseq
    %v1372 = vshrl.u32 %v1371, 7
    %v1373 = vsub.s32 %v1370, %v1372
    %v1374 = vrot.slane %v925, %v1373
    %vm1375 = vcmask 851712
    %v1376 = vsel %vm1375, %v1374, %v1369
    %v1377 = vadd.s32 %v1158, 4294967192
    %v1378 = vlaneseq
    %v1379 = vshrl.u32 %v1378, 7
    %v1380 = vsub.s32 %v1377, %v1379
    %v1381 = vrot.slane %v927, %v1380
    %vm1382 = vcmask 917312
    %v1383 = vsel %vm1382, %v1381, %v1376
    %v1384 = vadd.s32 %v1158, 4294967184
    %v1385 = vlaneseq
    %v1386 = vshrl.u32 %v1385, 7
    %v1387 = vsub.s32 %v1384, %v1386
    %v1388 = vrot.slane %v929, %v1387
    %vm1389 = vcmask 982912
    %v1390 = vsel %vm1389, %v1388, %v1383
    %v1391 = vadd.s32 %v1158, 4294967176
    %v1392 = vlaneseq
    %v1393 = vshrl.u32 %v1392, 7
    %v1394 = vsub.s32 %v1391, %v1393
    %v1395 = vrot.slane %v931, %v1394
    %vm1396 = vcmask 1048512
    %v1397 = vsel %vm1396, %v1395, %v1390
    %v1398 = vlaneseq
    %v1399 = vshrl.u32 %v1398, 7
    %v1400 = vsub.s32 %v1158, %v1399
    %v1401 = vrot.slane %v933, %v1400
    %v1402 = vlaneseq
    %v1403 = vshrl.u32 %v1402, 7
    %v1404 = vsub.s32 %v1293, %v1403
    %v1405 = vrot.slane %v935, %v1404
    %v1406 = vsel %vm1298, %v1405, %v1401
    %v1407 = vlaneseq
    %v1408 = vshrl.u32 %v1407, 7
    %v1409 = vsub.s32 %v1300, %v1408
    %v1410 = vrot.slane %v937, %v1409
    %v1411 = vsel %vm1305, %v1410, %v1406
    %v1412 = vlaneseq
    %v1413 = vshrl.u32 %v1412, 7
    %v1414 = vsub.s32 %v1307, %v1413
    %v1415 = vrot.slane %v939, %v1414
    %v1416 = vsel %vm1312, %v1415, %v1411
    %v1417 = vlaneseq
    %v1418 = vshrl.u32 %v1417, 7
    %v1419 = vsub.s32 %v1314, %v1418
    %v1420 = vrot.slane %v941, %v1419
    %v1421 = vsel %vm1319, %v1420, %v1416
    %v1422 = vlaneseq
    %v1423 = vshrl.u32 %v1422, 7
    %v1424 = vsub.s32 %v1321, %v1423
    %v1425 = vrot.slane %v943, %v1424
    %v1426 = vsel %vm1326, %v1425, %v1421
    %v1427 = vlaneseq
    %v1428 = vshrl.u32 %v1427, 7
    %v1429 = vsub.s32 %v1328, %v1428
    %v1430 = vrot.slane %v945, %v1429
    %v1431 = vsel %vm1333, %v1430, %v1426
    %v1432 = vlaneseq
    %v1433 = vshrl.u32 %v1432, 7
    %v1434 = vsub.s32 %v1335, %v1433
    %v1435 = vrot.slane %v947, %v1434
    %v1436 = vsel %vm1340, %v1435, %v1431
    %v1437 = vlaneseq
    %v1438 = vshrl.u32 %v1437, 7
    %v1439 = vsub.s32 %v1342, %v1438
    %v1440 = vrot.slane %v949, %v1439
    %v1441 = vsel %vm1347, %v1440, %v1436
    %v1442 = vlaneseq
    %v1443 = vshrl.u32 %v1442, 7
    %v1444 = vsub.s32 %v1349, %v1443
    %v1445 = vrot.slane %v951, %v1444
    %v1446 = vsel %vm1354, %v1445, %v1441
    %v1447 = vlaneseq
    %v1448 = vshrl.u32 %v1447, 7
    %v1449 = vsub.s32 %v1356, %v1448
    %v1450 = vrot.slane %v953, %v1449
    %v1451 = vsel %vm1361, %v1450, %v1446
    %v1452 = vlaneseq
    %v1453 = vshrl.u32 %v1452, 7
    %v1454 = vsub.s32 %v1363, %v1453
    %v1455 = vrot.slane %v955, %v1454
    %v1456 = vsel %vm1368, %v1455, %v1451
    %v1457 = vlaneseq
    %v1458 = vshrl.u32 %v1457, 7
    %v1459 = vsub.s32 %v1370, %v1458
    %v1460 = vrot.slane %v957, %v1459
    %v1461 = vsel %vm1375, %v1460, %v1456
    %v1462 = vlaneseq
    %v1463 = vshrl.u32 %v1462, 7
    %v1464 = vsub.s32 %v1377, %v1463
    %v1465 = vrot.slane %v959, %v1464
    %v1466 = vsel %vm1382, %v1465, %v1461
    %v1467 = vlaneseq
    %v1468 = vshrl.u32 %v1467, 7
    %v1469 = vsub.s32 %v1384, %v1468
    %v1470 = vrot.slane %v961, %v1469
    %v1471 = vsel %vm1389, %v1470, %v1466
    %v1472 = vlaneseq
    %v1473 = vshrl.u32 %v1472, 7
    %v1474 = vsub.s32 %v1391, %v1473
    %v1475 = vrot.slane %v963, %v1474
    %v1476 = vsel %vm1396, %v1475, %v1471
    %v1477 = vlaneseq
    %v1478 = vshrl.u32 %v1477, 7
    %v1479 = vsub.s32 %v1158, %v1478
    %v1480 = vrot.slane %v965, %v1479
    %v1481 = vlaneseq
    %v1482 = vshrl.u32 %v1481, 7
    %v1483 = vsub.s32 %v1293, %v1482
    %v1484 = vrot.slane %v967, %v1483
    %v1485 = vsel %vm1298, %v1484, %v1480
    %v1486 = vlaneseq
    %v1487 = vshrl.u32 %v1486, 7
    %v1488 = vsub.s32 %v1300, %v1487
    %v1489 = vrot.slane %v969, %v1488
    %v1490 = vsel %vm1305, %v1489, %v1485
    %v1491 = vlaneseq
    %v1492 = vshrl.u32 %v1491, 7
    %v1493 = vsub.s32 %v1307, %v1492
    %v1494 = vrot.slane %v971, %v1493
    %v1495 = vsel %vm1312, %v1494, %v1490
    %v1496 = vlaneseq
    %v1497 = vshrl.u32 %v1496, 7
    %v1498 = vsub.s32 %v1314, %v1497
    %v1499 = vrot.slane %v973, %v1498
    %v1500 = vsel %vm1319, %v1499, %v1495
    %v1501 = vlaneseq
    %v1502 = vshrl.u32 %v1501, 7
    %v1503 = vsub.s32 %v1321, %v1502
    %v1504 = vrot.slane %v975, %v1503
    %v1505 = vsel %vm1326, %v1504, %v1500
    %v1506 = vlaneseq
    %v1507 = vshrl.u32 %v1506, 7
    %v1508 = vsub.s32 %v1328, %v1507
    %v1509 = vrot.slane %v977, %v1508
    %v1510 = vsel %vm1333, %v1509, %v1505
    %v1511 = vlaneseq
    %v1512 = vshrl.u32 %v1511, 7
    %v1513 = vsub.s32 %v1335, %v1512
    %v1514 = vrot.slane %v979, %v1513
    %v1515 = vsel %vm1340, %v1514, %v1510
    %v1516 = vlaneseq
    %v1517 = vshrl.u32 %v1516, 7
    %v1518 = vsub.s32 %v1342, %v1517
    %v1519 = vrot.slane %v981, %v1518
    %v1520 = vsel %vm1347, %v1519, %v1515
    %v1521 = vlaneseq
    %v1522 = vshrl.u32 %v1521, 7
    %v1523 = vsub.s32 %v1349, %v1522
    %v1524 = vrot.slane %v983, %v1523
    %v1525 = vsel %vm1354, %v1524, %v1520
    %v1526 = vlaneseq
    %v1527 = vshrl.u32 %v1526, 7
    %v1528 = vsub.s32 %v1356, %v1527
    %v1529 = vrot.slane %v985, %v1528
    %v1530 = vsel %vm1361, %v1529, %v1525
    %v1531 = vlaneseq
    %v1532 = vshrl.u32 %v1531, 7
    %v1533 = vsub.s32 %v1363, %v1532
    %v1534 = vrot.slane %v987, %v1533
    %v1535 = vsel %vm1368, %v1534, %v1530
    %v1536 = vlaneseq
    %v1537 = vshrl.u32 %v1536, 7
    %v1538 = vsub.s32 %v1370, %v1537
    %v1539 = vrot.slane %v989, %v1538
    %v1540 = vsel %vm1375, %v1539, %v1535
    %v1541 = vlaneseq
    %v1542 = vshrl.u32 %v1541, 7
    %v1543 = vsub.s32 %v1377, %v1542
    %v1544 = vrot.slane %v991, %v1543
    %v1545 = vsel %vm1382, %v1544, %v1540
    %v1546 = vlaneseq
    %v1547 = vshrl.u32 %v1546, 7
    %v1548 = vsub.s32 %v1384, %v1547
    %v1549 = vrot.slane %v993, %v1548
    %v1550 = vsel %vm1389, %v1549, %v1545
    %v1551 = vlaneseq
    %v1552 = vshrl.u32 %v1551, 7
    %v1553 = vsub.s32 %v1391, %v1552
    %v1554 = vrot.slane %v995, %v1553
    %v1555 = vsel %vm1396, %v1554, %v1550
    %v1556 = vlaneseq
    %v1557 = vshrl.u32 %v1556, 7
    %v1558 = vsub.s32 %v1158, %v1557
    %v1559 = vrot.slane %v997, %v1558
    %v1560 = vlaneseq
    %v1561 = vshrl.u32 %v1560, 7
    %v1562 = vsub.s32 %v1293, %v1561
    %v1563 = vrot.slane %v999, %v1562
    %v1564 = vsel %vm1298, %v1563, %v1559
    %v1565 = vlaneseq
    %v1566 = vshrl.u32 %v1565, 7
    %v1567 = vsub.s32 %v1300, %v1566
    %v1568 = vrot.slane %v1001, %v1567
    %v1569 = vsel %vm1305, %v1568, %v1564
    %v1570 = vlaneseq
    %v1571 = vshrl.u32 %v1570, 7
    %v1572 = vsub.s32 %v1307, %v1571
    %v1573 = vrot.slane %v1003, %v1572
    %v1574 = vsel %vm1312, %v1573, %v1569
    %v1575 = vlaneseq
    %v1576 = vshrl.u32 %v1575, 7
    %v1577 = vsub.s32 %v1314, %v1576
    %v1578 = vrot.slane %v1005, %v1577
    %v1579 = vsel %vm1319, %v1578, %v1574
    %v1580 = vlaneseq
    %v1581 = vshrl.u32 %v1580, 7
    %v1582 = vsub.s32 %v1321, %v1581
    %v1583 = vrot.slane %v1007, %v1582
    %v1584 = vsel %vm1326, %v1583, %v1579
    %v1585 = vlaneseq
    %v1586 = vshrl.u32 %v1585, 7
    %v1587 = vsub.s32 %v1328, %v1586
    %v1588 = vrot.slane %v1009, %v1587
    %v1589 = vsel %vm1333, %v1588, %v1584
    %v1590 = vlaneseq
    %v1591 = vshrl.u32 %v1590, 7
    %v1592 = vsub.s32 %v1335, %v1591
    %v1593 = vrot.slane %v1011, %v1592
    %v1594 = vsel %vm1340, %v1593, %v1589
    %v1595 = vlaneseq
    %v1596 = vshrl.u32 %v1595, 7
    %v1597 = vsub.s32 %v1342, %v1596
    %v1598 = vrot.slane %v1013, %v1597
    %v1599 = vsel %vm1347, %v1598, %v1594
    %v1600 = vlaneseq
    %v1601 = vshrl.u32 %v1600, 7
    %v1602 = vsub.s32 %v1349, %v1601
    %v1603 = vrot.slane %v1015, %v1602
    %v1604 = vsel %vm1354, %v1603, %v1599
    %v1605 = vlaneseq
    %v1606 = vshrl.u32 %v1605, 7
    %v1607 = vsub.s32 %v1356, %v1606
    %v1608 = vrot.slane %v1017, %v1607
    %v1609 = vsel %vm1361, %v1608, %v1604
    %v1610 = vlaneseq
    %v1611 = vshrl.u32 %v1610, 7
    %v1612 = vsub.s32 %v1363, %v1611
    %v1613 = vrot.slane %v1019, %v1612
    %v1614 = vsel %vm1368, %v1613, %v1609
    %v1615 = vlaneseq
    %v1616 = vshrl.u32 %v1615, 7
    %v1617 = vsub.s32 %v1370, %v1616
    %v1618 = vrot.slane %v1021, %v1617
    %v1619 = vsel %vm1375, %v1618, %v1614
    %v1620 = vlaneseq
    %v1621 = vshrl.u32 %v1620, 7
    %v1622 = vsub.s32 %v1377, %v1621
    %v1623 = vrot.slane %v1023, %v1622
    %v1624 = vsel %vm1382, %v1623, %v1619
    %v1625 = vlaneseq
    %v1626 = vshrl.u32 %v1625, 7
    %v1627 = vsub.s32 %v1384, %v1626
    %v1628 = vrot.slane %v1025, %v1627
    %v1629 = vsel %vm1389, %v1628, %v1624
    %v1630 = vlaneseq
    %v1631 = vshrl.u32 %v1630, 7
    %v1632 = vsub.s32 %v1391, %v1631
    %v1633 = vrot.slane %v1027, %v1632
    %v1634 = vsel %vm1396, %v1633, %v1629
    %v1635 = vlaneseq
    %v1636 = vshrl.u32 %v1635, 7
    %v1637 = vsub.s32 %v1158, %v1636
    %v1638 = vrot.slane %v1029, %v1637
    %v1639 = vlaneseq
    %v1640 = vshrl.u32 %v1639, 7
    %v1641 = vsub.s32 %v1293, %v1640
    %v1642 = vrot.slane %v1031, %v1641
    %v1643 = vsel %vm1298, %v1642, %v1638
    %v1644 = vlaneseq
    %v1645 = vshrl.u32 %v1644, 7
    %v1646 = vsub.s32 %v1300, %v1645
    %v1647 = vrot.slane %v1033, %v1646
    %v1648 = vsel %vm1305, %v1647, %v1643
    %v1649 = vlaneseq
    %v1650 = vshrl.u32 %v1649, 7
    %v1651 = vsub.s32 %v1307, %v1650
    %v1652 = vrot.slane %v1035, %v1651
    %v1653 = vsel %vm1312, %v1652, %v1648
    %v1654 = vlaneseq
    %v1655 = vshrl.u32 %v1654, 7
    %v1656 = vsub.s32 %v1314, %v1655
    %v1657 = vrot.slane %v1037, %v1656
    %v1658 = vsel %vm1319, %v1657, %v1653
    %v1659 = vlaneseq
    %v1660 = vshrl.u32 %v1659, 7
    %v1661 = vsub.s32 %v1321, %v1660
    %v1662 = vrot.slane %v1039, %v1661
    %v1663 = vsel %vm1326, %v1662, %v1658
    %v1664 = vlaneseq
    %v1665 = vshrl.u32 %v1664, 7
    %v1666 = vsub.s32 %v1328, %v1665
    %v1667 = vrot.slane %v1041, %v1666
    %v1668 = vsel %vm1333, %v1667, %v1663
    %v1669 = vlaneseq
    %v1670 = vshrl.u32 %v1669, 7
    %v1671 = vsub.s32 %v1335, %v1670
    %v1672 = vrot.slane %v1043, %v1671
    %v1673 = vsel %vm1340, %v1672, %v1668
    %v1674 = vlaneseq
    %v1675 = vshrl.u32 %v1674, 7
    %v1676 = vsub.s32 %v1342, %v1675
    %v1677 = vrot.slane %v1045, %v1676
    %v1678 = vsel %vm1347, %v1677, %v1673
    %v1679 = vlaneseq
    %v1680 = vshrl.u32 %v1679, 7
    %v1681 = vsub.s32 %v1349, %v1680
    %v1682 = vrot.slane %v1047, %v1681
    %v1683 = vsel %vm1354, %v1682, %v1678
    %v1684 = vlaneseq
    %v1685 = vshrl.u32 %v1684, 7
    %v1686 = vsub.s32 %v1356, %v1685
    %v1687 = vrot.slane %v1049, %v1686
    %v1688 = vsel %vm1361, %v1687, %v1683
    %v1689 = vlaneseq
    %v1690 = vshrl.u32 %v1689, 7
    %v1691 = vsub.s32 %v1363, %v1690
    %v1692 = vrot.slane %v1051, %v1691
    %v1693 = vsel %vm1368, %v1692, %v1688
    %v1694 = vlaneseq
    %v1695 = vshrl.u32 %v1694, 7
    %v1696 = vsub.s32 %v1370, %v1695
    %v1697 = vrot.slane %v1053, %v1696
    %v1698 = vsel %vm1375, %v1697, %v1693
    %v1699 = vlaneseq
    %v1700 = vshrl.u32 %v1699, 7
    %v1701 = vsub.s32 %v1377, %v1700
    %v1702 = vrot.slane %v1055, %v1701
    %v1703 = vsel %vm1382, %v1702, %v1698
    %v1704 = vlaneseq
    %v1705 = vshrl.u32 %v1704, 7
    %v1706 = vsub.s32 %v1384, %v1705
    %v1707 = vrot.slane %v1057, %v1706
    %v1708 = vsel %vm1389, %v1707, %v1703
    %v1709 = vlaneseq
    %v1710 = vshrl.u32 %v1709, 7
    %v1711 = vsub.s32 %v1391, %v1710
    %v1712 = vrot.slane %v1059, %v1711
    %v1713 = vsel %vm1396, %v1712, %v1708
    %v1714 = vlaneseq
    %v1715 = vshrl.u32 %v1714, 7
    %v1716 = vsub.s32 %v1158, %v1715
    %v1717 = vrot.slane %v1061, %v1716
    %v1718 = vlaneseq
    %v1719 = vshrl.u32 %v1718, 7
    %v1720 = vsub.s32 %v1293, %v1719
    %v1721 = vrot.slane %v1063, %v1720
    %v1722 = vsel %vm1298, %v1721, %v1717
    %v1723 = vlaneseq
    %v1724 = vshrl.u32 %v1723, 7
    %v1725 = vsub.s32 %v1300, %v1724
    %v1726 = vrot.slane %v1065, %v1725
    %v1727 = vsel %vm1305, %v1726, %v1722
    %v1728 = vlaneseq
    %v1729 = vshrl.u32 %v1728, 7
    %v1730 = vsub.s32 %v1307, %v1729
    %v1731 = vrot.slane %v1067, %v1730
    %v1732 = vsel %vm1312, %v1731, %v1727
    %v1733 = vlaneseq
    %v1734 = vshrl.u32 %v1733, 7
    %v1735 = vsub.s32 %v1314, %v1734
    %v1736 = vrot.slane %v1069, %v1735
    %v1737 = vsel %vm1319, %v1736, %v1732
    %v1738 = vlaneseq
    %v1739 = vshrl.u32 %v1738, 7
    %v1740 = vsub.s32 %v1321, %v1739
    %v1741 = vrot.slane %v1071, %v1740
    %v1742 = vsel %vm1326, %v1741, %v1737
    %v1743 = vlaneseq
    %v1744 = vshrl.u32 %v1743, 7
    %v1745 = vsub.s32 %v1328, %v1744
    %v1746 = vrot.slane %v1073, %v1745
    %v1747 = vsel %vm1333, %v1746, %v1742
    %v1748 = vlaneseq
    %v1749 = vshrl.u32 %v1748, 7
    %v1750 = vsub.s32 %v1335, %v1749
    %v1751 = vrot.slane %v1075, %v1750
    %v1752 = vsel %vm1340, %v1751, %v1747
    %v1753 = vlaneseq
    %v1754 = vshrl.u32 %v1753, 7
    %v1755 = vsub.s32 %v1342, %v1754
    %v1756 = vrot.slane %v1077, %v1755
    %v1757 = vsel %vm1347, %v1756, %v1752
    %v1758 = vlaneseq
    %v1759 = vshrl.u32 %v1758, 7
    %v1760 = vsub.s32 %v1349, %v1759
    %v1761 = vrot.slane %v1079, %v1760
    %v1762 = vsel %vm1354, %v1761, %v1757
    %v1763 = vlaneseq
    %v1764 = vshrl.u32 %v1763, 7
    %v1765 = vsub.s32 %v1356, %v1764
    %v1766 = vrot.slane %v1081, %v1765
    %v1767 = vsel %vm1361, %v1766, %v1762
    %v1768 = vlaneseq
    %v1769 = vshrl.u32 %v1768, 7
    %v1770 = vsub.s32 %v1363, %v1769
    %v1771 = vrot.slane %v1083, %v1770
    %v1772 = vsel %vm1368, %v1771, %v1767
    %v1773 = vlaneseq
    %v1774 = vshrl.u32 %v1773, 7
    %v1775 = vsub.s32 %v1370, %v1774
    %v1776 = vrot.slane %v1085, %v1775
    %v1777 = vsel %vm1375, %v1776, %v1772
    %v1778 = vlaneseq
    %v1779 = vshrl.u32 %v1778, 7
    %v1780 = vsub.s32 %v1377, %v1779
    %v1781 = vrot.slane %v1087, %v1780
    %v1782 = vsel %vm1382, %v1781, %v1777
    %v1783 = vlaneseq
    %v1784 = vshrl.u32 %v1783, 7
    %v1785 = vsub.s32 %v1384, %v1784
    %v1786 = vrot.slane %v1089, %v1785
    %v1787 = vsel %vm1389, %v1786, %v1782
    %v1788 = vlaneseq
    %v1789 = vshrl.u32 %v1788, 7
    %v1790 = vsub.s32 %v1391, %v1789
    %v1791 = vrot.slane %v1091, %v1790
    %v1792 = vsel %vm1396, %v1791, %v1787
    %v1793 = vlaneseq
    %v1794 = vshrl.u32 %v1793, 7
    %v1795 = vsub.s32 %v1158, %v1794
    %v1796 = vrot.slane %v1093, %v1795
    %v1797 = vlaneseq
    %v1798 = vshrl.u32 %v1797, 7
    %v1799 = vsub.s32 %v1293, %v1798
    %v1800 = vrot.slane %v1095, %v1799
    %v1801 = vsel %vm1298, %v1800, %v1796
    %v1802 = vlaneseq
    %v1803 = vshrl.u32 %v1802, 7
    %v1804 = vsub.s32 %v1300, %v1803
    %v1805 = vrot.slane %v1097, %v1804
    %v1806 = vsel %vm1305, %v1805, %v1801
    %v1807 = vlaneseq
    %v1808 = vshrl.u32 %v1807, 7
    %v1809 = vsub.s32 %v1307, %v1808
    %v1810 = vrot.slane %v1099, %v1809
    %v1811 = vsel %vm1312, %v1810, %v1806
    %v1812 = vlaneseq
    %v1813 = vshrl.u32 %v1812, 7
    %v1814 = vsub.s32 %v1314, %v1813
    %v1815 = vrot.slane %v1101, %v1814
    %v1816 = vsel %vm1319, %v1815, %v1811
    %v1817 = vlaneseq
    %v1818 = vshrl.u32 %v1817, 7
    %v1819 = vsub.s32 %v1321, %v1818
    %v1820 = vrot.slane %v1103, %v1819
    %v1821 = vsel %vm1326, %v1820, %v1816
    %v1822 = vlaneseq
    %v1823 = vshrl.u32 %v1822, 7
    %v1824 = vsub.s32 %v1328, %v1823
    %v1825 = vrot.slane %v1105, %v1824
    %v1826 = vsel %vm1333, %v1825, %v1821
    %v1827 = vlaneseq
    %v1828 = vshrl.u32 %v1827, 7
    %v1829 = vsub.s32 %v1335, %v1828
    %v1830 = vrot.slane %v1107, %v1829
    %v1831 = vsel %vm1340, %v1830, %v1826
    %v1832 = vlaneseq
    %v1833 = vshrl.u32 %v1832, 7
    %v1834 = vsub.s32 %v1342, %v1833
    %v1835 = vrot.slane %v1109, %v1834
    %v1836 = vsel %vm1347, %v1835, %v1831
    %v1837 = vlaneseq
    %v1838 = vshrl.u32 %v1837, 7
    %v1839 = vsub.s32 %v1349, %v1838
    %v1840 = vrot.slane %v1111, %v1839
    %v1841 = vsel %vm1354, %v1840, %v1836
    %v1842 = vlaneseq
    %v1843 = vshrl.u32 %v1842, 7
    %v1844 = vsub.s32 %v1356, %v1843
    %v1845 = vrot.slane %v1113, %v1844
    %v1846 = vsel %vm1361, %v1845, %v1841
    %v1847 = vlaneseq
    %v1848 = vshrl.u32 %v1847, 7
    %v1849 = vsub.s32 %v1363, %v1848
    %v1850 = vrot.slane %v1115, %v1849
    %v1851 = vsel %vm1368, %v1850, %v1846
    %v1852 = vlaneseq
    %v1853 = vshrl.u32 %v1852, 7
    %v1854 = vsub.s32 %v1370, %v1853
    %v1855 = vrot.slane %v1117, %v1854
    %v1856 = vsel %vm1375, %v1855, %v1851
    %v1857 = vlaneseq
    %v1858 = vshrl.u32 %v1857, 7
    %v1859 = vsub.s32 %v1377, %v1858
    %v1860 = vrot.slane %v1119, %v1859
    %v1861 = vsel %vm1382, %v1860, %v1856
    %v1862 = vlaneseq
    %v1863 = vshrl.u32 %v1862, 7
    %v1864 = vsub.s32 %v1384, %v1863
    %v1865 = vrot.slane %v1121, %v1864
    %v1866 = vsel %vm1389, %v1865, %v1861
    %v1867 = vlaneseq
    %v1868 = vshrl.u32 %v1867, 7
    %v1869 = vsub.s32 %v1391, %v1868
    %v1870 = vrot.slane %v1123, %v1869
    %v1871 = vsel %vm1396, %v1870, %v1866
    %v1872 = vlaneseq
    %v1873 = vshrl.u32 %v1872, 7
    %v1874 = vsub.s32 %v1158, %v1873
    %v1875 = vrot.slane %v1125, %v1874
    %v1876 = vlaneseq
    %v1877 = vshrl.u32 %v1876, 7
    %v1878 = vsub.s32 %v1293, %v1877
    %v1879 = vrot.slane %v1127, %v1878
    %v1880 = vsel %vm1298, %v1879, %v1875
    %v1881 = vlaneseq
    %v1882 = vshrl.u32 %v1881, 7
    %v1883 = vsub.s32 %v1300, %v1882
    %v1884 = vrot.slane %v1129, %v1883
    %v1885 = vsel %vm1305, %v1884, %v1880
    %v1886 = vlaneseq
    %v1887 = vshrl.u32 %v1886, 7
    %v1888 = vsub.s32 %v1307, %v1887
    %v1889 = vrot.slane %v1131, %v1888
    %v1890 = vsel %vm1312, %v1889, %v1885
    %v1891 = vlaneseq
    %v1892 = vshrl.u32 %v1891, 7
    %v1893 = vsub.s32 %v1314, %v1892
    %v1894 = vrot.slane %v1133, %v1893
    %v1895 = vsel %vm1319, %v1894, %v1890
    %v1896 = vlaneseq
    %v1897 = vshrl.u32 %v1896, 7
    %v1898 = vsub.s32 %v1321, %v1897
    %v1899 = vrot.slane %v1135, %v1898
    %v1900 = vsel %vm1326, %v1899, %v1895
    %v1901 = vlaneseq
    %v1902 = vshrl.u32 %v1901, 7
    %v1903 = vsub.s32 %v1328, %v1902
    %v1904 = vrot.slane %v1137, %v1903
    %v1905 = vsel %vm1333, %v1904, %v1900
    %v1906 = vlaneseq
    %v1907 = vshrl.u32 %v1906, 7
    %v1908 = vsub.s32 %v1335, %v1907
    %v1909 = vrot.slane %v1139, %v1908
    %v1910 = vsel %vm1340, %v1909, %v1905
    %v1911 = vlaneseq
    %v1912 = vshrl.u32 %v1911, 7
    %v1913 = vsub.s32 %v1342, %v1912
    %v1914 = vrot.slane %v1141, %v1913
    %v1915 = vsel %vm1347, %v1914, %v1910
    %v1916 = vlaneseq
    %v1917 = vshrl.u32 %v1916, 7
    %v1918 = vsub.s32 %v1349, %v1917
    %v1919 = vrot.slane %v1143, %v1918
    %v1920 = vsel %vm1354, %v1919, %v1915
    %v1921 = vlaneseq
    %v1922 = vshrl.u32 %v1921, 7
    %v1923 = vsub.s32 %v1356, %v1922
    %v1924 = vrot.slane %v1145, %v1923
    %v1925 = vsel %vm1361, %v1924, %v1920
    %v1926 = vlaneseq
    %v1927 = vshrl.u32 %v1926, 7
    %v1928 = vsub.s32 %v1363, %v1927
    %v1929 = vrot.slane %v1147, %v1928
    %v1930 = vsel %vm1368, %v1929, %v1925
    %v1931 = vlaneseq
    %v1932 = vshrl.u32 %v1931, 7
    %v1933 = vsub.s32 %v1370, %v1932
    %v1934 = vrot.slane %v1149, %v1933
    %v1935 = vsel %vm1375, %v1934, %v1930
    %v1936 = vlaneseq
    %v1937 = vshrl.u32 %v1936, 7
    %v1938 = vsub.s32 %v1377, %v1937
    %v1939 = vrot.slane %v1151, %v1938
    %v1940 = vsel %vm1382, %v1939, %v1935
    %v1941 = vlaneseq
    %v1942 = vshrl.u32 %v1941, 7
    %v1943 = vsub.s32 %v1384, %v1942
    %v1944 = vrot.slane %v1153, %v1943
    %v1945 = vsel %vm1389, %v1944, %v1940
    %v1946 = vlaneseq
    %v1947 = vshrl.u32 %v1946, 7
    %v1948 = vsub.s32 %v1391, %v1947
    %v1949 = vrot.slane %v1155, %v1948
    %v1950 = vsel %vm1396, %v1949, %v1945
    %vm1951 = vcmask 1041409
    %v1952 = vsel %vm1951, %v1476, %v1397
    %vm1953 = vcmask 1042434
    %v1954 = vsel %vm1953, %v1555, %v1952
    %vm1955 = vcmask 1043459
    %v1956 = vsel %vm1955, %v1634, %v1954
    %vm1957 = vcmask 1044484
    %v1958 = vsel %vm1957, %v1713, %v1956
    %vm1959 = vcmask 1045509
    %v1960 = vsel %vm1959, %v1792, %v1958
    %vm1961 = vcmask 1046534
    %v1962 = vsel %vm1961, %v1871, %v1960
    %vm1963 = vcmask 1047559
    %v1964 = vsel %vm1963, %v1950, %v1962
    %v1966 = vsel %vm1160, %v1964, -1e+30
    %1967 = vmax.xlane.f32.xlu0 %v1966
    %v1968 = vpop.xlane.xlu0 %1967
    %v1969 = vsub.f32 %v1966, %v1968
    %v1970 = vmul.f32 %v1969, 1.442695
    %v1971 = vpow.pop %v1970
    %1972 = vadd.xlane.f32.xlu0 %v1971
    %v1973 = vpop.xlane.xlu0 %1972
    %v1974 = vrcp.pop %v1973
    %v1975 = vmul.f32 %v1971, %v1974
    %v1976 = vlaneseq
    %v1977 = vshrl.u32 %v1976, 7
    %v1978 = vsub.s32 0, %v1977
    %v1979 = vrot.slane %v1975, %v1978
    %1981 = vbcast.lane.b32.xlu0 %v1979, 256
    %v1982 = vpop.permute.xlu0 %1981
    %s1984 = sor.u32 256, 8
    %1985 = vbcast.lane.b32.xlu0 %v1979, %s1984
    %v1986 = vpop.permute.xlu0 %1985
    %s1988 = sor.u32 256, 16
    %1989 = vbcast.lane.b32.xlu0 %v1979, %s1988
    %v1990 = vpop.permute.xlu0 %1989
    %s1992 = sor.u32 256, 24
    %1993 = vbcast.lane.b32.xlu0 %v1979, %s1992
    %v1994 = vpop.permute.xlu0 %1993
    %s1996 = sor.u32 256, 32
    %1997 = vbcast.lane.b32.xlu0 %v1979, %s1996
    %v1998 = vpop.permute.xlu0 %1997
    %s2000 = sor.u32 256, 40
    %2001 = vbcast.lane.b32.xlu0 %v1979, %s2000
    %v2002 = vpop.permute.xlu0 %2001
    %s2004 = sor.u32 256, 48
    %2005 = vbcast.lane.b32.xlu0 %v1979, %s2004
    %v2006 = vpop.permute.xlu0 %2005
    %s2008 = sor.u32 256, 56
    %2009 = vbcast.lane.b32.xlu0 %v1979, %s2008
    %v2010 = vpop.permute.xlu0 %2009
    %s2012 = sor.u32 256, 64
    %2013 = vbcast.lane.b32.xlu0 %v1979, %s2012
    %v2014 = vpop.permute.xlu0 %2013
    %s2016 = sor.u32 256, 72
    %2017 = vbcast.lane.b32.xlu0 %v1979, %s2016
    %v2018 = vpop.permute.xlu0 %2017
    %s2020 = sor.u32 256, 80
    %2021 = vbcast.lane.b32.xlu0 %v1979, %s2020
    %v2022 = vpop.permute.xlu0 %2021
    %s2024 = sor.u32 256, 88
    %2025 = vbcast.lane.b32.xlu0 %v1979, %s2024
    %v2026 = vpop.permute.xlu0 %2025
    %s2028 = sor.u32 256, 96
    %2029 = vbcast.lane.b32.xlu0 %v1979, %s2028
    %v2030 = vpop.permute.xlu0 %2029
    %s2032 = sor.u32 256, 104
    %2033 = vbcast.lane.b32.xlu0 %v1979, %s2032
    %v2034 = vpop.permute.xlu0 %2033
    %s2036 = sor.u32 256, 112
    %2037 = vbcast.lane.b32.xlu0 %v1979, %s2036
    %v2038 = vpop.permute.xlu0 %2037
    %s2040 = sor.u32 256, 120
    %2041 = vbcast.lane.b32.xlu0 %v1979, %s2040
    %v2042 = vpop.permute.xlu0 %2041
    %v2043 = vlaneseq
    %v2044 = vshrl.u32 %v2043, 7
    %v2045 = vsub.s32 1, %v2044
    %v2046 = vrot.slane %v1975, %v2045
    %2048 = vbcast.lane.b32.xlu0 %v2046, 256
    %v2049 = vpop.permute.xlu0 %2048
    %s2051 = sor.u32 256, 8
    %2052 = vbcast.lane.b32.xlu0 %v2046, %s2051
    %v2053 = vpop.permute.xlu0 %2052
    %s2055 = sor.u32 256, 16
    %2056 = vbcast.lane.b32.xlu0 %v2046, %s2055
    %v2057 = vpop.permute.xlu0 %2056
    %s2059 = sor.u32 256, 24
    %2060 = vbcast.lane.b32.xlu0 %v2046, %s2059
    %v2061 = vpop.permute.xlu0 %2060
    %s2063 = sor.u32 256, 32
    %2064 = vbcast.lane.b32.xlu0 %v2046, %s2063
    %v2065 = vpop.permute.xlu0 %2064
    %s2067 = sor.u32 256, 40
    %2068 = vbcast.lane.b32.xlu0 %v2046, %s2067
    %v2069 = vpop.permute.xlu0 %2068
    %s2071 = sor.u32 256, 48
    %2072 = vbcast.lane.b32.xlu0 %v2046, %s2071
    %v2073 = vpop.permute.xlu0 %2072
    %s2075 = sor.u32 256, 56
    %2076 = vbcast.lane.b32.xlu0 %v2046, %s2075
    %v2077 = vpop.permute.xlu0 %2076
    %s2079 = sor.u32 256, 64
    %2080 = vbcast.lane.b32.xlu0 %v2046, %s2079
    %v2081 = vpop.permute.xlu0 %2080
    %s2083 = sor.u32 256, 72
    %2084 = vbcast.lane.b32.xlu0 %v2046, %s2083
    %v2085 = vpop.permute.xlu0 %2084
    %s2087 = sor.u32 256, 80
    %2088 = vbcast.lane.b32.xlu0 %v2046, %s2087
    %v2089 = vpop.permute.xlu0 %2088
    %s2091 = sor.u32 256, 88
    %2092 = vbcast.lane.b32.xlu0 %v2046, %s2091
    %v2093 = vpop.permute.xlu0 %2092
    %s2095 = sor.u32 256, 96
    %2096 = vbcast.lane.b32.xlu0 %v2046, %s2095
    %v2097 = vpop.permute.xlu0 %2096
    %s2099 = sor.u32 256, 104
    %2100 = vbcast.lane.b32.xlu0 %v2046, %s2099
    %v2101 = vpop.permute.xlu0 %2100
    %s2103 = sor.u32 256, 112
    %2104 = vbcast.lane.b32.xlu0 %v2046, %s2103
    %v2105 = vpop.permute.xlu0 %2104
    %s2107 = sor.u32 256, 120
    %2108 = vbcast.lane.b32.xlu0 %v2046, %s2107
    %v2109 = vpop.permute.xlu0 %2108
    %v2110 = vlaneseq
    %v2111 = vshrl.u32 %v2110, 7
    %v2112 = vsub.s32 2, %v2111
    %v2113 = vrot.slane %v1975, %v2112
    %2115 = vbcast.lane.b32.xlu0 %v2113, 256
    %v2116 = vpop.permute.xlu0 %2115
    %s2118 = sor.u32 256, 8
    %2119 = vbcast.lane.b32.xlu0 %v2113, %s2118
    %v2120 = vpop.permute.xlu0 %2119
    %s2122 = sor.u32 256, 16
    %2123 = vbcast.lane.b32.xlu0 %v2113, %s2122
    %v2124 = vpop.permute.xlu0 %2123
    %s2126 = sor.u32 256, 24
    %2127 = vbcast.lane.b32.xlu0 %v2113, %s2126
    %v2128 = vpop.permute.xlu0 %2127
    %s2130 = sor.u32 256, 32
    %2131 = vbcast.lane.b32.xlu0 %v2113, %s2130
    %v2132 = vpop.permute.xlu0 %2131
    %s2134 = sor.u32 256, 40
    %2135 = vbcast.lane.b32.xlu0 %v2113, %s2134
    %v2136 = vpop.permute.xlu0 %2135
    %s2138 = sor.u32 256, 48
    %2139 = vbcast.lane.b32.xlu0 %v2113, %s2138
    %v2140 = vpop.permute.xlu0 %2139
    %s2142 = sor.u32 256, 56
    %2143 = vbcast.lane.b32.xlu0 %v2113, %s2142
    %v2144 = vpop.permute.xlu0 %2143
    %s2146 = sor.u32 256, 64
    %2147 = vbcast.lane.b32.xlu0 %v2113, %s2146
    %v2148 = vpop.permute.xlu0 %2147
    %s2150 = sor.u32 256, 72
    %2151 = vbcast.lane.b32.xlu0 %v2113, %s2150
    %v2152 = vpop.permute.xlu0 %2151
    %s2154 = sor.u32 256, 80
    %2155 = vbcast.lane.b32.xlu0 %v2113, %s2154
    %v2156 = vpop.permute.xlu0 %2155
    %s2158 = sor.u32 256, 88
    %2159 = vbcast.lane.b32.xlu0 %v2113, %s2158
    %v2160 = vpop.permute.xlu0 %2159
    %s2162 = sor.u32 256, 96
    %2163 = vbcast.lane.b32.xlu0 %v2113, %s2162
    %v2164 = vpop.permute.xlu0 %2163
    %s2166 = sor.u32 256, 104
    %2167 = vbcast.lane.b32.xlu0 %v2113, %s2166
    %v2168 = vpop.permute.xlu0 %2167
    %s2170 = sor.u32 256, 112
    %2171 = vbcast.lane.b32.xlu0 %v2113, %s2170
    %v2172 = vpop.permute.xlu0 %2171
    %s2174 = sor.u32 256, 120
    %2175 = vbcast.lane.b32.xlu0 %v2113, %s2174
    %v2176 = vpop.permute.xlu0 %2175
    %v2177 = vlaneseq
    %v2178 = vshrl.u32 %v2177, 7
    %v2179 = vsub.s32 3, %v2178
    %v2180 = vrot.slane %v1975, %v2179
    %2182 = vbcast.lane.b32.xlu0 %v2180, 256
    %v2183 = vpop.permute.xlu0 %2182
    %s2185 = sor.u32 256, 8
    %2186 = vbcast.lane.b32.xlu0 %v2180, %s2185
    %v2187 = vpop.permute.xlu0 %2186
    %s2189 = sor.u32 256, 16
    %2190 = vbcast.lane.b32.xlu0 %v2180, %s2189
    %v2191 = vpop.permute.xlu0 %2190
    %s2193 = sor.u32 256, 24
    %2194 = vbcast.lane.b32.xlu0 %v2180, %s2193
    %v2195 = vpop.permute.xlu0 %2194
    %s2197 = sor.u32 256, 32
    %2198 = vbcast.lane.b32.xlu0 %v2180, %s2197
    %v2199 = vpop.permute.xlu0 %2198
    %s2201 = sor.u32 256, 40
    %2202 = vbcast.lane.b32.xlu0 %v2180, %s2201
    %v2203 = vpop.permute.xlu0 %2202
    %s2205 = sor.u32 256, 48
    %2206 = vbcast.lane.b32.xlu0 %v2180, %s2205
    %v2207 = vpop.permute.xlu0 %2206
    %s2209 = sor.u32 256, 56
    %2210 = vbcast.lane.b32.xlu0 %v2180, %s2209
    %v2211 = vpop.permute.xlu0 %2210
    %s2213 = sor.u32 256, 64
    %2214 = vbcast.lane.b32.xlu0 %v2180, %s2213
    %v2215 = vpop.permute.xlu0 %2214
    %s2217 = sor.u32 256, 72
    %2218 = vbcast.lane.b32.xlu0 %v2180, %s2217
    %v2219 = vpop.permute.xlu0 %2218
    %s2221 = sor.u32 256, 80
    %2222 = vbcast.lane.b32.xlu0 %v2180, %s2221
    %v2223 = vpop.permute.xlu0 %2222
    %s2225 = sor.u32 256, 88
    %2226 = vbcast.lane.b32.xlu0 %v2180, %s2225
    %v2227 = vpop.permute.xlu0 %2226
    %s2229 = sor.u32 256, 96
    %2230 = vbcast.lane.b32.xlu0 %v2180, %s2229
    %v2231 = vpop.permute.xlu0 %2230
    %s2233 = sor.u32 256, 104
    %2234 = vbcast.lane.b32.xlu0 %v2180, %s2233
    %v2235 = vpop.permute.xlu0 %2234
    %s2237 = sor.u32 256, 112
    %2238 = vbcast.lane.b32.xlu0 %v2180, %s2237
    %v2239 = vpop.permute.xlu0 %2238
    %s2241 = sor.u32 256, 120
    %2242 = vbcast.lane.b32.xlu0 %v2180, %s2241
    %v2243 = vpop.permute.xlu0 %2242
    %v2244 = vlaneseq
    %v2245 = vshrl.u32 %v2244, 7
    %v2246 = vsub.s32 4, %v2245
    %v2247 = vrot.slane %v1975, %v2246
    %2249 = vbcast.lane.b32.xlu0 %v2247, 256
    %v2250 = vpop.permute.xlu0 %2249
    %s2252 = sor.u32 256, 8
    %2253 = vbcast.lane.b32.xlu0 %v2247, %s2252
    %v2254 = vpop.permute.xlu0 %2253
    %s2256 = sor.u32 256, 16
    %2257 = vbcast.lane.b32.xlu0 %v2247, %s2256
    %v2258 = vpop.permute.xlu0 %2257
    %s2260 = sor.u32 256, 24
    %2261 = vbcast.lane.b32.xlu0 %v2247, %s2260
    %v2262 = vpop.permute.xlu0 %2261
    %s2264 = sor.u32 256, 32
    %2265 = vbcast.lane.b32.xlu0 %v2247, %s2264
    %v2266 = vpop.permute.xlu0 %2265
    %s2268 = sor.u32 256, 40
    %2269 = vbcast.lane.b32.xlu0 %v2247, %s2268
    %v2270 = vpop.permute.xlu0 %2269
    %s2272 = sor.u32 256, 48
    %2273 = vbcast.lane.b32.xlu0 %v2247, %s2272
    %v2274 = vpop.permute.xlu0 %2273
    %s2276 = sor.u32 256, 56
    %2277 = vbcast.lane.b32.xlu0 %v2247, %s2276
    %v2278 = vpop.permute.xlu0 %2277
    %s2280 = sor.u32 256, 64
    %2281 = vbcast.lane.b32.xlu0 %v2247, %s2280
    %v2282 = vpop.permute.xlu0 %2281
    %s2284 = sor.u32 256, 72
    %2285 = vbcast.lane.b32.xlu0 %v2247, %s2284
    %v2286 = vpop.permute.xlu0 %2285
    %s2288 = sor.u32 256, 80
    %2289 = vbcast.lane.b32.xlu0 %v2247, %s2288
    %v2290 = vpop.permute.xlu0 %2289
    %s2292 = sor.u32 256, 88
    %2293 = vbcast.lane.b32.xlu0 %v2247, %s2292
    %v2294 = vpop.permute.xlu0 %2293
    %s2296 = sor.u32 256, 96
    %2297 = vbcast.lane.b32.xlu0 %v2247, %s2296
    %v2298 = vpop.permute.xlu0 %2297
    %s2300 = sor.u32 256, 104
    %2301 = vbcast.lane.b32.xlu0 %v2247, %s2300
    %v2302 = vpop.permute.xlu0 %2301
    %s2304 = sor.u32 256, 112
    %2305 = vbcast.lane.b32.xlu0 %v2247, %s2304
    %v2306 = vpop.permute.xlu0 %2305
    %s2308 = sor.u32 256, 120
    %2309 = vbcast.lane.b32.xlu0 %v2247, %s2308
    %v2310 = vpop.permute.xlu0 %2309
    %v2311 = vlaneseq
    %v2312 = vshrl.u32 %v2311, 7
    %v2313 = vsub.s32 5, %v2312
    %v2314 = vrot.slane %v1975, %v2313
    %2316 = vbcast.lane.b32.xlu0 %v2314, 256
    %v2317 = vpop.permute.xlu0 %2316
    %s2319 = sor.u32 256, 8
    %2320 = vbcast.lane.b32.xlu0 %v2314, %s2319
    %v2321 = vpop.permute.xlu0 %2320
    %s2323 = sor.u32 256, 16
    %2324 = vbcast.lane.b32.xlu0 %v2314, %s2323
    %v2325 = vpop.permute.xlu0 %2324
    %s2327 = sor.u32 256, 24
    %2328 = vbcast.lane.b32.xlu0 %v2314, %s2327
    %v2329 = vpop.permute.xlu0 %2328
    %s2331 = sor.u32 256, 32
    %2332 = vbcast.lane.b32.xlu0 %v2314, %s2331
    %v2333 = vpop.permute.xlu0 %2332
    %s2335 = sor.u32 256, 40
    %2336 = vbcast.lane.b32.xlu0 %v2314, %s2335
    %v2337 = vpop.permute.xlu0 %2336
    %s2339 = sor.u32 256, 48
    %2340 = vbcast.lane.b32.xlu0 %v2314, %s2339
    %v2341 = vpop.permute.xlu0 %2340
    %s2343 = sor.u32 256, 56
    %2344 = vbcast.lane.b32.xlu0 %v2314, %s2343
    %v2345 = vpop.permute.xlu0 %2344
    %s2347 = sor.u32 256, 64
    %2348 = vbcast.lane.b32.xlu0 %v2314, %s2347
    %v2349 = vpop.permute.xlu0 %2348
    %s2351 = sor.u32 256, 72
    %2352 = vbcast.lane.b32.xlu0 %v2314, %s2351
    %v2353 = vpop.permute.xlu0 %2352
    %s2355 = sor.u32 256, 80
    %2356 = vbcast.lane.b32.xlu0 %v2314, %s2355
    %v2357 = vpop.permute.xlu0 %2356
    %s2359 = sor.u32 256, 88
    %2360 = vbcast.lane.b32.xlu0 %v2314, %s2359
    %v2361 = vpop.permute.xlu0 %2360
    %s2363 = sor.u32 256, 96
    %2364 = vbcast.lane.b32.xlu0 %v2314, %s2363
    %v2365 = vpop.permute.xlu0 %2364
    %s2367 = sor.u32 256, 104
    %2368 = vbcast.lane.b32.xlu0 %v2314, %s2367
    %v2369 = vpop.permute.xlu0 %2368
    %s2371 = sor.u32 256, 112
    %2372 = vbcast.lane.b32.xlu0 %v2314, %s2371
    %v2373 = vpop.permute.xlu0 %2372
    %s2375 = sor.u32 256, 120
    %2376 = vbcast.lane.b32.xlu0 %v2314, %s2375
    %v2377 = vpop.permute.xlu0 %2376
    %v2378 = vlaneseq
    %v2379 = vshrl.u32 %v2378, 7
    %v2380 = vsub.s32 6, %v2379
    %v2381 = vrot.slane %v1975, %v2380
    %2383 = vbcast.lane.b32.xlu0 %v2381, 256
    %v2384 = vpop.permute.xlu0 %2383
    %s2386 = sor.u32 256, 8
    %2387 = vbcast.lane.b32.xlu0 %v2381, %s2386
    %v2388 = vpop.permute.xlu0 %2387
    %s2390 = sor.u32 256, 16
    %2391 = vbcast.lane.b32.xlu0 %v2381, %s2390
    %v2392 = vpop.permute.xlu0 %2391
    %s2394 = sor.u32 256, 24
    %2395 = vbcast.lane.b32.xlu0 %v2381, %s2394
    %v2396 = vpop.permute.xlu0 %2395
    %s2398 = sor.u32 256, 32
    %2399 = vbcast.lane.b32.xlu0 %v2381, %s2398
    %v2400 = vpop.permute.xlu0 %2399
    %s2402 = sor.u32 256, 40
    %2403 = vbcast.lane.b32.xlu0 %v2381, %s2402
    %v2404 = vpop.permute.xlu0 %2403
    %s2406 = sor.u32 256, 48
    %2407 = vbcast.lane.b32.xlu0 %v2381, %s2406
    %v2408 = vpop.permute.xlu0 %2407
    %s2410 = sor.u32 256, 56
    %2411 = vbcast.lane.b32.xlu0 %v2381, %s2410
    %v2412 = vpop.permute.xlu0 %2411
    %s2414 = sor.u32 256, 64
    %2415 = vbcast.lane.b32.xlu0 %v2381, %s2414
    %v2416 = vpop.permute.xlu0 %2415
    %s2418 = sor.u32 256, 72
    %2419 = vbcast.lane.b32.xlu0 %v2381, %s2418
    %v2420 = vpop.permute.xlu0 %2419
    %s2422 = sor.u32 256, 80
    %2423 = vbcast.lane.b32.xlu0 %v2381, %s2422
    %v2424 = vpop.permute.xlu0 %2423
    %s2426 = sor.u32 256, 88
    %2427 = vbcast.lane.b32.xlu0 %v2381, %s2426
    %v2428 = vpop.permute.xlu0 %2427
    %s2430 = sor.u32 256, 96
    %2431 = vbcast.lane.b32.xlu0 %v2381, %s2430
    %v2432 = vpop.permute.xlu0 %2431
    %s2434 = sor.u32 256, 104
    %2435 = vbcast.lane.b32.xlu0 %v2381, %s2434
    %v2436 = vpop.permute.xlu0 %2435
    %s2438 = sor.u32 256, 112
    %2439 = vbcast.lane.b32.xlu0 %v2381, %s2438
    %v2440 = vpop.permute.xlu0 %2439
    %s2442 = sor.u32 256, 120
    %2443 = vbcast.lane.b32.xlu0 %v2381, %s2442
    %v2444 = vpop.permute.xlu0 %2443
    %v2445 = vlaneseq
    %v2446 = vshrl.u32 %v2445, 7
    %v2447 = vsub.s32 7, %v2446
    %v2448 = vrot.slane %v1975, %v2447
    %2450 = vbcast.lane.b32.xlu0 %v2448, 256
    %v2451 = vpop.permute.xlu0 %2450
    %s2453 = sor.u32 256, 8
    %2454 = vbcast.lane.b32.xlu0 %v2448, %s2453
    %v2455 = vpop.permute.xlu0 %2454
    %s2457 = sor.u32 256, 16
    %2458 = vbcast.lane.b32.xlu0 %v2448, %s2457
    %v2459 = vpop.permute.xlu0 %2458
    %s2461 = sor.u32 256, 24
    %2462 = vbcast.lane.b32.xlu0 %v2448, %s2461
    %v2463 = vpop.permute.xlu0 %2462
    %s2465 = sor.u32 256, 32
    %2466 = vbcast.lane.b32.xlu0 %v2448, %s2465
    %v2467 = vpop.permute.xlu0 %2466
    %s2469 = sor.u32 256, 40
    %2470 = vbcast.lane.b32.xlu0 %v2448, %s2469
    %v2471 = vpop.permute.xlu0 %2470
    %s2473 = sor.u32 256, 48
    %2474 = vbcast.lane.b32.xlu0 %v2448, %s2473
    %v2475 = vpop.permute.xlu0 %2474
    %s2477 = sor.u32 256, 56
    %2478 = vbcast.lane.b32.xlu0 %v2448, %s2477
    %v2479 = vpop.permute.xlu0 %2478
    %s2481 = sor.u32 256, 64
    %2482 = vbcast.lane.b32.xlu0 %v2448, %s2481
    %v2483 = vpop.permute.xlu0 %2482
    %s2485 = sor.u32 256, 72
    %2486 = vbcast.lane.b32.xlu0 %v2448, %s2485
    %v2487 = vpop.permute.xlu0 %2486
    %s2489 = sor.u32 256, 80
    %2490 = vbcast.lane.b32.xlu0 %v2448, %s2489
    %v2491 = vpop.permute.xlu0 %2490
    %s2493 = sor.u32 256, 88
    %2494 = vbcast.lane.b32.xlu0 %v2448, %s2493
    %v2495 = vpop.permute.xlu0 %2494
    %s2497 = sor.u32 256, 96
    %2498 = vbcast.lane.b32.xlu0 %v2448, %s2497
    %v2499 = vpop.permute.xlu0 %2498
    %s2501 = sor.u32 256, 104
    %2502 = vbcast.lane.b32.xlu0 %v2448, %s2501
    %v2503 = vpop.permute.xlu0 %2502
    %s2505 = sor.u32 256, 112
    %2506 = vbcast.lane.b32.xlu0 %v2448, %s2505
    %v2507 = vpop.permute.xlu0 %2506
    %s2509 = sor.u32 256, 120
    %2510 = vbcast.lane.b32.xlu0 %v2448, %s2509
    %v2511 = vpop.permute.xlu0 %2510
    %v2512 = vmul.f32 %v1982, %v554
    %v2513 = vmul.f32 %v1986, %v555
    %v2514 = vmul.f32 %v1990, %v556
    %v2515 = vmul.f32 %v1994, %v557
    %v2516 = vmul.f32 %v1998, %v558
    %v2517 = vmul.f32 %v2002, %v559
    %v2518 = vmul.f32 %v2006, %v560
    %v2519 = vmul.f32 %v2010, %v561
    %v2520 = vmul.f32 %v2014, %v562
    %v2521 = vmul.f32 %v2018, %v563
    %v2522 = vmul.f32 %v2022, %v564
    %v2523 = vmul.f32 %v2026, %v565
    %v2524 = vmul.f32 %v2030, %v566
    %v2525 = vmul.f32 %v2034, %v567
    %v2526 = vmul.f32 %v2038, %v568
    %v2527 = vmul.f32 %v2042, %v569
    %v2528 = vmul.f32 %v2049, %v570
    %v2529 = vmul.f32 %v2053, %v571
    %v2530 = vmul.f32 %v2057, %v572
    %v2531 = vmul.f32 %v2061, %v573
    %v2532 = vmul.f32 %v2065, %v574
    %v2533 = vmul.f32 %v2069, %v575
    %v2534 = vmul.f32 %v2073, %v576
    %v2535 = vmul.f32 %v2077, %v577
    %v2536 = vmul.f32 %v2081, %v578
    %v2537 = vmul.f32 %v2085, %v579
    %v2538 = vmul.f32 %v2089, %v580
    %v2539 = vmul.f32 %v2093, %v581
    %v2540 = vmul.f32 %v2097, %v582
    %v2541 = vmul.f32 %v2101, %v583
    %v2542 = vmul.f32 %v2105, %v584
    %v2543 = vmul.f32 %v2109, %v585
    %v2544 = vmul.f32 %v2116, %v586
    %v2545 = vmul.f32 %v2120, %v587
    %v2546 = vmul.f32 %v2124, %v588
    %v2547 = vmul.f32 %v2128, %v589
    %v2548 = vmul.f32 %v2132, %v590
    %v2549 = vmul.f32 %v2136, %v591
    %v2550 = vmul.f32 %v2140, %v592
    %v2551 = vmul.f32 %v2144, %v593
    %v2552 = vmul.f32 %v2148, %v594
    %v2553 = vmul.f32 %v2152, %v595
    %v2554 = vmul.f32 %v2156, %v596
    %v2555 = vmul.f32 %v2160, %v597
    %v2556 = vmul.f32 %v2164, %v598
    %v2557 = vmul.f32 %v2168, %v599
    %v2558 = vmul.f32 %v2172, %v600
    %v2559 = vmul.f32 %v2176, %v601
    %v2560 = vmul.f32 %v2183, %v602
    %v2561 = vmul.f32 %v2187, %v603
    %v2562 = vmul.f32 %v2191, %v604
    %v2563 = vmul.f32 %v2195, %v605
    %v2564 = vmul.f32 %v2199, %v606
    %v2565 = vmul.f32 %v2203, %v607
    %v2566 = vmul.f32 %v2207, %v608
    %v2567 = vmul.f32 %v2211, %v609
    %v2568 = vmul.f32 %v2215, %v610
    %v2569 = vmul.f32 %v2219, %v611
    %v2570 = vmul.f32 %v2223, %v612
    %v2571 = vmul.f32 %v2227, %v613
    %v2572 = vmul.f32 %v2231, %v614
    %v2573 = vmul.f32 %v2235, %v615
    %v2574 = vmul.f32 %v2239, %v616
    %v2575 = vmul.f32 %v2243, %v617
    %v2576 = vmul.f32 %v2250, %v618
    %v2577 = vmul.f32 %v2254, %v619
    %v2578 = vmul.f32 %v2258, %v620
    %v2579 = vmul.f32 %v2262, %v621
    %v2580 = vmul.f32 %v2266, %v622
    %v2581 = vmul.f32 %v2270, %v623
    %v2582 = vmul.f32 %v2274, %v624
    %v2583 = vmul.f32 %v2278, %v625
    %v2584 = vmul.f32 %v2282, %v626
    %v2585 = vmul.f32 %v2286, %v627
    %v2586 = vmul.f32 %v2290, %v628
    %v2587 = vmul.f32 %v2294, %v629
    %v2588 = vmul.f32 %v2298, %v630
    %v2589 = vmul.f32 %v2302, %v631
    %v2590 = vmul.f32 %v2306, %v632
    %v2591 = vmul.f32 %v2310, %v633
    %v2592 = vmul.f32 %v2317, %v634
    %v2593 = vmul.f32 %v2321, %v635
    %v2594 = vmul.f32 %v2325, %v636
    %v2595 = vmul.f32 %v2329, %v637
    %v2596 = vmul.f32 %v2333, %v638
    %v2597 = vmul.f32 %v2337, %v639
    %v2598 = vmul.f32 %v2341, %v640
    %v2599 = vmul.f32 %v2345, %v641
    %v2600 = vmul.f32 %v2349, %v642
    %v2601 = vmul.f32 %v2353, %v643
    %v2602 = vmul.f32 %v2357, %v644
    %v2603 = vmul.f32 %v2361, %v645
    %v2604 = vmul.f32 %v2365, %v646
    %v2605 = vmul.f32 %v2369, %v647
    %v2606 = vmul.f32 %v2373, %v648
    %v2607 = vmul.f32 %v2377, %v649
    %v2608 = vmul.f32 %v2384, %v650
    %v2609 = vmul.f32 %v2388, %v651
    %v2610 = vmul.f32 %v2392, %v652
    %v2611 = vmul.f32 %v2396, %v653
    %v2612 = vmul.f32 %v2400, %v654
    %v2613 = vmul.f32 %v2404, %v655
    %v2614 = vmul.f32 %v2408, %v656
    %v2615 = vmul.f32 %v2412, %v657
    %v2616 = vmul.f32 %v2416, %v658
    %v2617 = vmul.f32 %v2420, %v659
    %v2618 = vmul.f32 %v2424, %v660
    %v2619 = vmul.f32 %v2428, %v661
    %v2620 = vmul.f32 %v2432, %v662
    %v2621 = vmul.f32 %v2436, %v663
    %v2622 = vmul.f32 %v2440, %v664
    %v2623 = vmul.f32 %v2444, %v665
    %v2624 = vmul.f32 %v2451, %v666
    %v2625 = vmul.f32 %v2455, %v667
    %v2626 = vmul.f32 %v2459, %v668
    %v2627 = vmul.f32 %v2463, %v669
    %v2628 = vmul.f32 %v2467, %v670
    %v2629 = vmul.f32 %v2471, %v671
    %v2630 = vmul.f32 %v2475, %v672
    %v2631 = vmul.f32 %v2479, %v673
    %v2632 = vmul.f32 %v2483, %v674
    %v2633 = vmul.f32 %v2487, %v675
    %v2634 = vmul.f32 %v2491, %v676
    %v2635 = vmul.f32 %v2495, %v677
    %v2636 = vmul.f32 %v2499, %v678
    %v2637 = vmul.f32 %v2503, %v679
    %v2638 = vmul.f32 %v2507, %v680
    %v2639 = vmul.f32 %v2511, %v681
    %v2640 = vadd.f32 %v2512, %v2513
    %v2641 = vadd.f32 %v2640, %v2514
    %v2642 = vadd.f32 %v2641, %v2515
    %v2643 = vadd.f32 %v2642, %v2516
    %v2644 = vadd.f32 %v2643, %v2517
    %v2645 = vadd.f32 %v2644, %v2518
    %v2646 = vadd.f32 %v2645, %v2519
    %v2647 = vadd.f32 %v2646, %v2520
    %v2648 = vadd.f32 %v2647, %v2521
    %v2649 = vadd.f32 %v2648, %v2522
    %v2650 = vadd.f32 %v2649, %v2523
    %v2651 = vadd.f32 %v2650, %v2524
    %v2652 = vadd.f32 %v2651, %v2525
    %v2653 = vadd.f32 %v2652, %v2526
    %v2654 = vadd.f32 %v2653, %v2527
    %v2655 = vrot.slane %v2654, 4
    %v2656 = vadd.f32 %v2654, %v2655
    %v2657 = vrot.slane %v2656, 2
    %v2658 = vadd.f32 %v2656, %v2657
    %v2659 = vrot.slane %v2658, 1
    %v2660 = vadd.f32 %v2658, %v2659
    %v2661 = vadd.f32 %v2528, %v2529
    %v2662 = vadd.f32 %v2661, %v2530
    %v2663 = vadd.f32 %v2662, %v2531
    %v2664 = vadd.f32 %v2663, %v2532
    %v2665 = vadd.f32 %v2664, %v2533
    %v2666 = vadd.f32 %v2665, %v2534
    %v2667 = vadd.f32 %v2666, %v2535
    %v2668 = vadd.f32 %v2667, %v2536
    %v2669 = vadd.f32 %v2668, %v2537
    %v2670 = vadd.f32 %v2669, %v2538
    %v2671 = vadd.f32 %v2670, %v2539
    %v2672 = vadd.f32 %v2671, %v2540
    %v2673 = vadd.f32 %v2672, %v2541
    %v2674 = vadd.f32 %v2673, %v2542
    %v2675 = vadd.f32 %v2674, %v2543
    %v2676 = vrot.slane %v2675, 4
    %v2677 = vadd.f32 %v2675, %v2676
    %v2678 = vrot.slane %v2677, 2
    %v2679 = vadd.f32 %v2677, %v2678
    %v2680 = vrot.slane %v2679, 1
    %v2681 = vadd.f32 %v2679, %v2680
    %v2682 = vadd.f32 %v2544, %v2545
    %v2683 = vadd.f32 %v2682, %v2546
    %v2684 = vadd.f32 %v2683, %v2547
    %v2685 = vadd.f32 %v2684, %v2548
    %v2686 = vadd.f32 %v2685, %v2549
    %v2687 = vadd.f32 %v2686, %v2550
    %v2688 = vadd.f32 %v2687, %v2551
    %v2689 = vadd.f32 %v2688, %v2552
    %v2690 = vadd.f32 %v2689, %v2553
    %v2691 = vadd.f32 %v2690, %v2554
    %v2692 = vadd.f32 %v2691, %v2555
    %v2693 = vadd.f32 %v2692, %v2556
    %v2694 = vadd.f32 %v2693, %v2557
    %v2695 = vadd.f32 %v2694, %v2558
    %v2696 = vadd.f32 %v2695, %v2559
    %v2697 = vrot.slane %v2696, 4
    %v2698 = vadd.f32 %v2696, %v2697
    %v2699 = vrot.slane %v2698, 2
    %v2700 = vadd.f32 %v2698, %v2699
    %v2701 = vrot.slane %v2700, 1
    %v2702 = vadd.f32 %v2700, %v2701
    %v2703 = vadd.f32 %v2560, %v2561
    %v2704 = vadd.f32 %v2703, %v2562
    %v2705 = vadd.f32 %v2704, %v2563
    %v2706 = vadd.f32 %v2705, %v2564
    %v2707 = vadd.f32 %v2706, %v2565
    %v2708 = vadd.f32 %v2707, %v2566
    %v2709 = vadd.f32 %v2708, %v2567
    %v2710 = vadd.f32 %v2709, %v2568
    %v2711 = vadd.f32 %v2710, %v2569
    %v2712 = vadd.f32 %v2711, %v2570
    %v2713 = vadd.f32 %v2712, %v2571
    %v2714 = vadd.f32 %v2713, %v2572
    %v2715 = vadd.f32 %v2714, %v2573
    %v2716 = vadd.f32 %v2715, %v2574
    %v2717 = vadd.f32 %v2716, %v2575
    %v2718 = vrot.slane %v2717, 4
    %v2719 = vadd.f32 %v2717, %v2718
    %v2720 = vrot.slane %v2719, 2
    %v2721 = vadd.f32 %v2719, %v2720
    %v2722 = vrot.slane %v2721, 1
    %v2723 = vadd.f32 %v2721, %v2722
    %v2724 = vadd.f32 %v2576, %v2577
    %v2725 = vadd.f32 %v2724, %v2578
    %v2726 = vadd.f32 %v2725, %v2579
    %v2727 = vadd.f32 %v2726, %v2580
    %v2728 = vadd.f32 %v2727, %v2581
    %v2729 = vadd.f32 %v2728, %v2582
    %v2730 = vadd.f32 %v2729, %v2583
    %v2731 = vadd.f32 %v2730, %v2584
    %v2732 = vadd.f32 %v2731, %v2585
    %v2733 = vadd.f32 %v2732, %v2586
    %v2734 = vadd.f32 %v2733, %v2587
    %v2735 = vadd.f32 %v2734, %v2588
    %v2736 = vadd.f32 %v2735, %v2589
    %v2737 = vadd.f32 %v2736, %v2590
    %v2738 = vadd.f32 %v2737, %v2591
    %v2739 = vrot.slane %v2738, 4
    %v2740 = vadd.f32 %v2738, %v2739
    %v2741 = vrot.slane %v2740, 2
    %v2742 = vadd.f32 %v2740, %v2741
    %v2743 = vrot.slane %v2742, 1
    %v2744 = vadd.f32 %v2742, %v2743
    %v2745 = vadd.f32 %v2592, %v2593
    %v2746 = vadd.f32 %v2745, %v2594
    %v2747 = vadd.f32 %v2746, %v2595
    %v2748 = vadd.f32 %v2747, %v2596
    %v2749 = vadd.f32 %v2748, %v2597
    %v2750 = vadd.f32 %v2749, %v2598
    %v2751 = vadd.f32 %v2750, %v2599
    %v2752 = vadd.f32 %v2751, %v2600
    %v2753 = vadd.f32 %v2752, %v2601
    %v2754 = vadd.f32 %v2753, %v2602
    %v2755 = vadd.f32 %v2754, %v2603
    %v2756 = vadd.f32 %v2755, %v2604
    %v2757 = vadd.f32 %v2756, %v2605
    %v2758 = vadd.f32 %v2757, %v2606
    %v2759 = vadd.f32 %v2758, %v2607
    %v2760 = vrot.slane %v2759, 4
    %v2761 = vadd.f32 %v2759, %v2760
    %v2762 = vrot.slane %v2761, 2
    %v2763 = vadd.f32 %v2761, %v2762
    %v2764 = vrot.slane %v2763, 1
    %v2765 = vadd.f32 %v2763, %v2764
    %v2766 = vadd.f32 %v2608, %v2609
    %v2767 = vadd.f32 %v2766, %v2610
    %v2768 = vadd.f32 %v2767, %v2611
    %v2769 = vadd.f32 %v2768, %v2612
    %v2770 = vadd.f32 %v2769, %v2613
    %v2771 = vadd.f32 %v2770, %v2614
    %v2772 = vadd.f32 %v2771, %v2615
    %v2773 = vadd.f32 %v2772, %v2616
    %v2774 = vadd.f32 %v2773, %v2617
    %v2775 = vadd.f32 %v2774, %v2618
    %v2776 = vadd.f32 %v2775, %v2619
    %v2777 = vadd.f32 %v2776, %v2620
    %v2778 = vadd.f32 %v2777, %v2621
    %v2779 = vadd.f32 %v2778, %v2622
    %v2780 = vadd.f32 %v2779, %v2623
    %v2781 = vrot.slane %v2780, 4
    %v2782 = vadd.f32 %v2780, %v2781
    %v2783 = vrot.slane %v2782, 2
    %v2784 = vadd.f32 %v2782, %v2783
    %v2785 = vrot.slane %v2784, 1
    %v2786 = vadd.f32 %v2784, %v2785
    %v2787 = vadd.f32 %v2624, %v2625
    %v2788 = vadd.f32 %v2787, %v2626
    %v2789 = vadd.f32 %v2788, %v2627
    %v2790 = vadd.f32 %v2789, %v2628
    %v2791 = vadd.f32 %v2790, %v2629
    %v2792 = vadd.f32 %v2791, %v2630
    %v2793 = vadd.f32 %v2792, %v2631
    %v2794 = vadd.f32 %v2793, %v2632
    %v2795 = vadd.f32 %v2794, %v2633
    %v2796 = vadd.f32 %v2795, %v2634
    %v2797 = vadd.f32 %v2796, %v2635
    %v2798 = vadd.f32 %v2797, %v2636
    %v2799 = vadd.f32 %v2798, %v2637
    %v2800 = vadd.f32 %v2799, %v2638
    %v2801 = vadd.f32 %v2800, %v2639
    %v2802 = vrot.slane %v2801, 4
    %v2803 = vadd.f32 %v2801, %v2802
    %v2804 = vrot.slane %v2803, 2
    %v2805 = vadd.f32 %v2803, %v2804
    %v2806 = vrot.slane %v2805, 1
    %v2807 = vadd.f32 %v2805, %v2806
    %v2816 = vsel %vm1951, %v2681, %v2660
    %v2817 = vsel %vm1953, %v2702, %v2816
    %v2818 = vsel %vm1955, %v2723, %v2817
    %v2819 = vsel %vm1957, %v2744, %v2818
    %v2820 = vsel %vm1959, %v2765, %v2819
    %v2821 = vsel %vm1961, %v2786, %v2820
    %v2822 = vsel %vm1963, %v2807, %v2821
    %v2824 = vld [vmem:[#allocation12] sm:$0xff]
    %v2825 = vld [vmem:[#allocation12 + $0x8] sm:$0xff]
    %v2826 = vld [vmem:[#allocation12 + $0x10] sm:$0xff]
    %v2827 = vld [vmem:[#allocation12 + $0x18] sm:$0xff]
    %v2828 = vld [vmem:[#allocation12 + $0x20] sm:$0xff]
    %v2829 = vld [vmem:[#allocation12 + $0x28] sm:$0xff]
    %v2830 = vld [vmem:[#allocation12 + $0x30] sm:$0xff]
    %v2831 = vld [vmem:[#allocation12 + $0x38] sm:$0xff]
    %v2832 = vld [vmem:[#allocation12 + $0x40] sm:$0xff]
    %v2833 = vld [vmem:[#allocation12 + $0x48] sm:$0xff]
    %v2834 = vld [vmem:[#allocation12 + $0x50] sm:$0xff]
    %v2835 = vld [vmem:[#allocation12 + $0x58] sm:$0xff]
    %v2836 = vld [vmem:[#allocation12 + $0x60] sm:$0xff]
    %v2837 = vld [vmem:[#allocation12 + $0x68] sm:$0xff]
    %v2838 = vld [vmem:[#allocation12 + $0x70] sm:$0xff]
    %v2839 = vld [vmem:[#allocation12 + $0x78] sm:$0xff]
    %v2840 = vld [vmem:[#allocation12 + $0x80] sm:$0xff]
    %v2841 = vld [vmem:[#allocation12 + $0x88] sm:$0xff]
    %v2842 = vld [vmem:[#allocation12 + $0x90] sm:$0xff]
    %v2843 = vld [vmem:[#allocation12 + $0x98] sm:$0xff]
    %v2844 = vld [vmem:[#allocation12 + $0xa0] sm:$0xff]
    %v2845 = vld [vmem:[#allocation12 + $0xa8] sm:$0xff]
    %v2846 = vld [vmem:[#allocation12 + $0xb0] sm:$0xff]
    %v2847 = vld [vmem:[#allocation12 + $0xb8] sm:$0xff]
    %v2848 = vld [vmem:[#allocation12 + $0xc0] sm:$0xff]
    %v2849 = vld [vmem:[#allocation12 + $0xc8] sm:$0xff]
    %v2850 = vld [vmem:[#allocation12 + $0xd0] sm:$0xff]
    %v2851 = vld [vmem:[#allocation12 + $0xd8] sm:$0xff]
    %v2852 = vld [vmem:[#allocation12 + $0xe0] sm:$0xff]
    %v2853 = vld [vmem:[#allocation12 + $0xe8] sm:$0xff]
    %v2854 = vld [vmem:[#allocation12 + $0xf0] sm:$0xff]
    %v2855 = vld [vmem:[#allocation12 + $0xf8] sm:$0xff]
    %v2856 = vld [vmem:[%s9] sm:$0x1]
    %v2858 = vlaneseq
    %v2859 = vshrl.u32 %v2858, 7
    %v2860 = vsub.s32 0, %v2859
    %v2861 = vrot.slane %v2856, %v2860
    %2863 = vmatprep.subr.mxu0 0.0
    %2864 = vmatpush1.msra.mxu0 %v2839
    %2865 = vmatprep.subr.mxu0 0.0
    %2866 = vmatpush1.msra.mxu0 %v2838
    %2867 = vmatprep.subr.mxu0 0.0
    %2868 = vmatpush1.msra.mxu0 %v2837
    %2869 = vmatprep.subr.mxu0 0.0
    %2870 = vmatpush1.msra.mxu0 %v2836
    %2871 = vmatprep.subr.mxu0 0.0
    %2872 = vmatpush1.msra.mxu0 %v2835
    %2873 = vmatprep.subr.mxu0 0.0
    %2874 = vmatpush1.msra.mxu0 %v2834
    %2875 = vmatprep.subr.mxu0 0.0
    %2876 = vmatpush1.msra.mxu0 %v2833
    %2877 = vmatprep.subr.mxu0 0.0
    %2878 = vmatpush1.msra.mxu0 %v2832
    %2879 = vmatprep.subr.mxu0 0.0
    %2880 = vmatpush1.msra.mxu0 %v2831
    %2881 = vmatprep.subr.mxu0 0.0
    %2882 = vmatpush1.msra.mxu0 %v2830
    %2883 = vmatprep.subr.mxu0 0.0
    %2884 = vmatpush1.msra.mxu0 %v2829
    %2885 = vmatprep.subr.mxu0 0.0
    %2886 = vmatpush1.msra.mxu0 %v2828
    %2887 = vmatprep.subr.mxu0 0.0
    %2888 = vmatpush1.msra.mxu0 %v2827
    %2889 = vmatprep.subr.mxu0 0.0
    %2890 = vmatpush1.msra.mxu0 %v2826
    %2891 = vmatprep.subr.mxu0 0.0
    %2892 = vmatpush1.msra.mxu0 %v2825
    %2893 = vmatprep.subr.mxu0 0.0
    %2894 = vmatpush1.msra.mxu0 %v2824
    %2895 = vmatprep.subr.mxu0 0.0
    %2896 = vmatpush2.msra.mxu0 %v2855
    %2897 = vmatprep.subr.mxu0 0.0
    %2898 = vmatpush2.msra.mxu0 %v2854
    %2899 = vmatprep.subr.mxu0 0.0
    %2900 = vmatpush2.msra.mxu0 %v2853
    %2901 = vmatprep.subr.mxu0 0.0
    %2902 = vmatpush2.msra.mxu0 %v2852
    %2903 = vmatprep.subr.mxu0 0.0
    %2904 = vmatpush2.msra.mxu0 %v2851
    %2905 = vmatprep.subr.mxu0 0.0
    %2906 = vmatpush2.msra.mxu0 %v2850
    %2907 = vmatprep.subr.mxu0 0.0
    %2908 = vmatpush2.msra.mxu0 %v2849
    %2909 = vmatprep.subr.mxu0 0.0
    %2910 = vmatpush2.msra.mxu0 %v2848
    %2911 = vmatprep.subr.mxu0 0.0
    %2912 = vmatpush2.msra.mxu0 %v2847
    %2913 = vmatprep.subr.mxu0 0.0
    %2914 = vmatpush2.msra.mxu0 %v2846
    %2915 = vmatprep.subr.mxu0 0.0
    %2916 = vmatpush2.msra.mxu0 %v2845
    %2917 = vmatprep.subr.mxu0 0.0
    %2918 = vmatpush2.msra.mxu0 %v2844
    %2919 = vmatprep.subr.mxu0 0.0
    %2920 = vmatpush2.msra.mxu0 %v2843
    %2921 = vmatprep.subr.mxu0 0.0
    %2922 = vmatpush2.msra.mxu0 %v2842
    %2923 = vmatprep.subr.mxu0 0.0
    %2924 = vmatpush2.msra.mxu0 %v2841
    %2925 = vmatprep.subr.mxu0 0.0
    %2926 = vmatpush2.msra.mxu0 %v2840
    %2927 = vmatprep.mubr.f32.mxu0 %v2822
    %2928 = vmatmul.mubr.f32.gmra.mxu0 %v553
    %v2929 = vpop.f32.mrf.mxu0
    %v2930 = vadd.f32 %v2861, %v2929
    %v2931 = vpop.f32.mrf.mxu0
    %2932 = vdwg.mxu0
    %v2933 = vtanh.pop %v2930
    %2934 = vst [vmem:[#allocation14] sm:$0xff] %v2933
    %2935 = vst [vmem:[#allocation15] sm:$0xff] %v553
    %2936 = vst [vmem:[#allocation17] sm:$0xff] %v1975
    // Predicated region
    $region66: #{tpu_custom_call.1} parent=1 // pred_check
      _
    $region67: #{tpu_custom_call.1} parent=1 // pred_check_branch
      %2938 = sbr.rel (0) target = $region69
    $region68: #{tpu_custom_call.1} parent=1 // pred_region
      %s2940 = ssub.s32 128, 128
      %2941 = vsyncadd [#allocation5], %s2940
      %s2943 = sshll.u32 [#allocation14], 4
      %s2944 = int_to_ptr.vmem [resolvable:$true] %s2943
      %2946 = dma.vmem_to_hbm [thread:$0]  %s2944, 128, %s10, [#allocation5]
    $region69: #{tpu_custom_call.1} parent=1 // pred_fallthru
      _
    // Predicated region
    $region70: #{tpu_custom_call.1} parent=1 // pred_check
      _
    $region71: #{tpu_custom_call.1} parent=1 // pred_check_branch
      %2948 = sbr.rel (0) target = $region73
    $region72: #{tpu_custom_call.1} parent=1 // pred_region
      %s2950 = ssub.s32 128, 128
      %2951 = vsyncadd [#allocation16], %s2950
      %s2953 = sshll.u32 [#allocation15], 4
      %s2954 = int_to_ptr.vmem [resolvable:$true] %s2953
      %2956 = dma.vmem_to_hbm [thread:$0]  %s2954, 128, %s11, [#allocation16]
    $region73: #{tpu_custom_call.1} parent=1 // pred_fallthru
      _
    // Predicated region
    $region74: #{tpu_custom_call.1} parent=1 // pred_check
      _
    $region75: #{tpu_custom_call.1} parent=1 // pred_check_branch
      %2958 = sbr.rel (0) target = $region77
    $region76: #{tpu_custom_call.1} parent=1 // pred_region
      %s2960 = ssub.s32 128, 128
      %2961 = vsyncadd [#allocation16], %s2960
      %s2963 = sshll.u32 [#allocation17], 4
      %s2964 = int_to_ptr.vmem [resolvable:$true] %s2963
      %2966 = dma.vmem_to_hbm [thread:$0]  %s2964, 128, %s12, [#allocation16]
    $region77: #{tpu_custom_call.1} parent=1 // pred_fallthru
      _
    // Predicated region
    $region78: #{tpu_custom_call.1} parent=1 // pred_check
      _
    $region79: #{tpu_custom_call.1} parent=1 // pred_check_branch
      %2968 = sbr.rel (0) target = $region81
    $region80: #{tpu_custom_call.1} parent=1 // pred_region
      %2969 = dma.done [#allocation5], 128
    $region81: #{tpu_custom_call.1} parent=1 // pred_fallthru
      _
    // Predicated region
    $region82: #{tpu_custom_call.1} parent=1 // pred_check
      _
    $region83: #{tpu_custom_call.1} parent=1 // pred_check_branch
      %2971 = sbr.rel (0) target = $region85
    $region84: #{tpu_custom_call.1} parent=1 // pred_region
      %2972 = dma.done [#allocation16], 128
    $region85: #{tpu_custom_call.1} parent=1 // pred_fallthru
      _
    // Predicated region
    $region86: #{tpu_custom_call.1} parent=1 // pred_check
      _
    $region87: #{tpu_custom_call.1} parent=1 // pred_check_branch
      %2974 = sbr.rel (0) target = $region89
    $region88: #{tpu_custom_call.1} parent=1 // pred_region
      %2975 = dma.done [#allocation16], 128
    $region89: #{tpu_custom_call.1} parent=1 // pred_fallthru
      _
    %2976 = vsyncpa [#allocation4], 1
    %2977 = vsyncpa [#allocation7], 1
    %2978 = vsyncpa [#allocation10], 1
    %2979 = vsyncpa [#allocation13], 1
    %2980 = vsyncpa [#allocation5], 1
    %2981 = vsyncpa [#allocation16], 1

</llo_original>
